<compile_context>
chip_gen: v5e
topology: v5e:2x2
jax: 0.10.0
libtpu: 0.0.40
codegen_flags: <defaults>
</compile_context>

<pallas_src>
import functools

import jax
import jax.numpy as jnp
from jax import lax
from jax.experimental import pallas as pl
from jax.experimental.pallas import tpu as pltpu


# ----------------------------------------------------------------------------
# Fused kernel (one grid step per batch element)
# ----------------------------------------------------------------------------
def _up_doubleconv_kernel(x1_ref, x2_ref, up_ref, colpos_ref,
                          w1_ref, b1_ref, w2_ref, b2_ref,
                          o_ref,
                          slab1_ref, col1_ref, slab2_ref, col2_ref,
                          *, W, base):
    """Layouts (per batch element):
      x1_ref  : (1, C1, H1*W1)       un-upsampled skip input, flattened
      x2_ref  : (1, C2, H2*W2)       encoder feature, flattened
      up_ref  : (H1*W1, H2*W2)       upsample(bilinear,align_corners)+pad map
      colpos  : (1, H2*W2)           p % W  (for SAME-pad column masks)
      w1_ref  : (mid, 9*Cin)         conv1 weights, BN scale folded in
      b1_ref  : (mid, 1)             conv1 folded bias
      w2_ref  : (Cout, 9*mid)        conv2 weights, BN scale folded in
      b2_ref  : (Cout, 1)            conv2 folded bias
      o_ref   : (1, Cout, H2*W2)     lane-dense output
      slab*   : (C, L + 2*base)      zero-halo flattened image slabs (VMEM)
      col*    : (9*C, L)             im2col buffers (VMEM)
    """
    f32 = jnp.float32
    C2 = x2_ref.shape[1]
    Cin = slab1_ref.shape[0]
    mid = slab2_ref.shape[0]
    L = x2_ref.shape[2]                      # H2 * W2

    colpos = colpos_ref[...]                 # (1, L) int32
    keep_l = colpos > 0                      # valid when reading column x-1
    keep_r = colpos < (W - 1)                # valid when reading column x+1

    # --- Upsample(2x, bilinear, align_corners=True) + F.pad as ONE matmul ---
    x1u = lax.dot_general(x1_ref[0].astype(f32), up_ref[...],
                          dimension_numbers=(((1,), (0,)), ((), ())),
                          preferred_element_type=f32)            # (C1, L)

    # --- torch.cat([x2, x1], dim=1) + zero halo, all inside a VMEM slab -----
    slab1_ref[...] = jnp.zeros_like(slab1_ref)
    slab1_ref[0:C2, base:base + L] = x2_ref[0].astype(f32)
    slab1_ref[C2:Cin, base:base + L] = x1u

    def im2col(slab_ref, col_ref, cin):
        # 9 shifted windows of the flattened, zero-haloed slab -> (9*cin, L).
        # Horizontal taps mask columns that wrapped across a row boundary,
        # which together with the halo realises SAME (pad=1) convolution.
        for t in range(9):
            dy, dx = t // 3 - 1, t % 3 - 1
            s = base + dy * W + dx
            win = slab_ref[:, s:s + L]
            if dx == -1:
                win = jnp.where(keep_l, win, 0.0)
            elif dx == 1:
                win = jnp.where(keep_r, win, 0.0)
            col_ref[t * cin:(t + 1) * cin, :] = win

    # --- conv1 3x3 + folded BN + ReLU: one K = 9*Cin matmul, lanes = H*W ----
    im2col(slab1_ref, col1_ref, Cin)
    h1 = lax.dot_general(w1_ref[...], col1_ref[...],
                         dimension_numbers=(((1,), (0,)), ((), ())),
                         preferred_element_type=f32)             # (mid, L)
    h1 = jnp.maximum(h1 + b1_ref[...], 0.0)

    # --- conv2 3x3 + folded BN + ReLU, straight from VMEM (no HBM trip) -----
    slab2_ref[...] = jnp.zeros_like(slab2_ref)
    slab2_ref[:, base:base + L] = h1
    im2col(slab2_ref, col2_ref, mid)
    h2 = lax.dot_general(w2_ref[...], col2_ref[...],
                         dimension_numbers=(((1,), (0,)), ((), ())),
                         preferred_element_type=f32)             # (Cout, L)
    o_ref[0] = jnp.maximum(h2 + b2_ref[...], 0.0).astype(o_ref.dtype)


# ----------------------------------------------------------------------------
# Host-side parameter preparation
# ----------------------------------------------------------------------------
def _upsample_pad_matrix(H1, W1, H2, W2):
    """Linear map (H1*W1) -> (H2*W2): 2x bilinear align_corners upsample then
    F.pad to the x2 spatial size.  Returned as (H1*W1, H2*W2) so that
    x1_flat (C, H1*W1) @ M gives the padded, upsampled image (flattened)."""
    def up_mat(n_in):
        n_out = 2 * n_in
        if n_in == 1:
            return jnp.ones((n_out, 1), jnp.float32)
        src = jnp.arange(n_out, dtype=jnp.float32) * (n_in - 1) / (n_out - 1)
        i0 = jnp.clip(jnp.floor(src).astype(jnp.int32), 0, n_in - 2)
        frac = src - i0.astype(jnp.float32)
        rows = jnp.arange(n_out)
        m = jnp.zeros((n_out, n_in), jnp.float32)
        m = m.at[rows, i0].add(1.0 - frac)
        m = m.at[rows, i0 + 1].add(frac)
        return m

    u_h, u_w = up_mat(H1), up_mat(W1)
    dy, dx = H2 - 2 * H1, W2 - 2 * W1
    u_h_pad = jnp.zeros((H2, H1), jnp.float32).at[dy // 2:dy // 2 + 2 * H1, :].set(u_h)
    u_w_pad = jnp.zeros((W2, W1), jnp.float32).at[dx // 2:dx // 2 + 2 * W1, :].set(u_w)
    return jnp.kron(u_h_pad, u_w_pad).T          # (H1*W1, H2*W2)


def _fold_conv(w_hwio, scale, bias):
    """(3,3,Cin,Cout) HWIO conv weight + folded-BN scale/bias ->
    (Cout, 9*Cin) matrix with scale pre-multiplied, and (Cout, 1) bias."""
    cin, cout = w_hwio.shape[2], w_hwio.shape[3]
    w_mat = jnp.transpose(w_hwio, (3, 0, 1, 2)).reshape(cout, 9 * cin)
    return ((w_mat * scale[:, None]).astype(jnp.float32),
            bias.reshape(cout, 1).astype(jnp.float32))


# ----------------------------------------------------------------------------
# Public wrapper: matches Up.forward(x1, x2); NCHW in, NCHW out
# ----------------------------------------------------------------------------
def up_forward(params, x1_nchw, x2_nchw):
    N, C1, H1, W1 = x1_nchw.shape
    N2, C2, H2, W2 = x2_nchw.shape
    assert N == N2
    Cin = C1 + C2
    L1, L2 = H1 * W1, H2 * W2
    mid = params["w1"].shape[-1]
    Cout = params["w2"].shape[-1]

    # Flattened channel-major views (contiguous -> free reshapes in HBM).
    x1f = x1_nchw.reshape(N, C1, L1)
    x2f = x2_nchw.reshape(N, C2, L2)

    up_m = _upsample_pad_matrix(H1, W1, H2, W2)                  # (L1, L2)
    colpos = (jnp.arange(L2, dtype=jnp.int32) % W2).reshape(1, L2)
    w1m, b1 = _fold_conv(params["w1"], params["scale1"], params["bias1"])
    w2m, b2 = _fold_conv(params["w2"], params["scale2"], params["bias2"])

    # Flattened-slab geometry: zero halo of `base` columns on each side,
    # lane-aligned (multiple of 128) so interior stores are unmasked.
    base = ((W2 + 1 + 127) // 128) * 128
    Lp = L2 + 2 * base

    kernel = functools.partial(_up_doubleconv_kernel, W=W2, base=base)

    out_flat = pl.pallas_call(
        kernel,
        out_shape=jax.ShapeDtypeStruct((N, Cout, L2), x2_nchw.dtype),
        grid=(N,),
        in_specs=[
            pl.BlockSpec((1, C1, L1), lambda n: (n, 0, 0)),      # x1 flattened
            pl.BlockSpec((1, C2, L2), lambda n: (n, 0, 0)),      # x2 flattened
            pl.BlockSpec((L1, L2), lambda n: (0, 0)),            # upsample+pad map
            pl.BlockSpec((1, L2), lambda n: (0, 0)),             # column index p % W
            pl.BlockSpec((mid, 9 * Cin), lambda n: (0, 0)),      # conv1 weights
            pl.BlockSpec((mid, 1), lambda n: (0, 0)),            # conv1 bias
            pl.BlockSpec((Cout, 9 * mid), lambda n: (0, 0)),     # conv2 weights
            pl.BlockSpec((Cout, 1), lambda n: (0, 0)),           # conv2 bias
        ],
        out_specs=pl.BlockSpec((1, Cout, L2), lambda n: (n, 0, 0)),
        scratch_shapes=[
            pltpu.VMEM((Cin, Lp), jnp.float32),       # conv1 zero-halo slab
            pltpu.VMEM((9 * Cin, L2), jnp.float32),   # conv1 im2col
            pltpu.VMEM((mid, Lp), jnp.float32),       # conv2 zero-halo slab
            pltpu.VMEM((9 * mid, L2), jnp.float32),   # conv2 im2col
        ],
        compiler_params=pltpu.CompilerParams(
            dimension_semantics=("parallel",)),
    )(x1f, x2f, up_m, colpos, w1m, b1, w2m, b2)

    return out_flat.reshape(N, Cout, H2, W2)


# ----------------------------------------------------------------------------
# Pure-JAX reference (NCHW, lax.conv) for validation
# ----------------------------------------------------------------------------
def _conv3x3_bn_relu_ref(x_nchw, w_hwio, scale, bias):
    y = lax.conv_general_dilated(
        x_nchw, w_hwio, window_strides=(1, 1), padding="SAME",
        dimension_numbers=("NCHW", "HWIO", "NCHW"))
    return jnp.maximum(y * scale[None, :, None, None]
                       + bias[None, :, None, None], 0.0)


def _upsample2x_bilinear_ref(x):   # NCHW, align_corners=True
    N, C, H, W = x.shape

    def coords(n_in, n_out):
        if n_in == 1:
            z = jnp.zeros((n_out,), jnp.int32)
            return z, z, jnp.zeros((n_out,), jnp.float32)
        src = jnp.arange(n_out, dtype=jnp.float32) * (n_in - 1) / (n_out - 1)
        i0 = jnp.clip(jnp.floor(src).astype(jnp.int32), 0, n_in - 2)
        return i0, i0 + 1, src - i0.astype(jnp.float32)

    y0, y1, fy = coords(H, 2 * H)
    x0, x1, fx = coords(W, 2 * W)
    rows = (x[:, :, y0, :] * (1.0 - fy)[None, None, :, None]
            + x[:, :, y1, :] * fy[None, None, :, None])
    return (rows[:, :, :, x0] * (1.0 - fx)[None, None, None, :]
            + rows[:, :, :, x1] * fx[None, None, None, :])


def _up_forward_ref(params, x1, x2):
    x1 = _upsample2x_bilinear_ref(x1)
    dy = x2.shape[2] - x1.shape[2]
    dx = x2.shape[3] - x1.shape[3]
    x1 = jnp.pad(x1, ((0, 0), (0, 0),
                      (dy // 2, dy - dy // 2), (dx // 2, dx - dx // 2)))
    x = jnp.concatenate([x2, x1], axis=1)
    h = _conv3x3_bn_relu_ref(x, params["w1"], params["scale1"], params["bias1"])
    return _conv3x3_bn_relu_ref(h, params["w2"], params["scale2"], params["bias2"])


# ----------------------------------------------------------------------------
# Deterministic parameters for Up(in_channels=8, out_channels=4, bilinear=True)
# ----------------------------------------------------------------------------
def make_params(key, in_channels, out_channels):
    mid_channels = in_channels // 2
    eps = 1e-5
    ks = jax.random.split(key, 8)

    def conv_bn(kw, kb, kg, kbeta, cin, cout):
        w = jax.random.normal(kw, (3, 3, cin, cout), jnp.float32) * 0.1
        b = jax.random.normal(kb, (cout,), jnp.float32) * 0.05
        gamma = 1.0 + 0.1 * jax.random.normal(kg, (cout,), jnp.float32)
        beta = 0.05 * jax.random.normal(kbeta, (cout,), jnp.float32)
        # eval-mode BN (running_mean=0, running_var=1) folded with conv bias
        scale = gamma / jnp.sqrt(1.0 + eps)
        bias = scale * b + beta
        return w, scale, bias

    w1, s1, b1 = conv_bn(ks[0], ks[1], ks[2], ks[3], in_channels, mid_channels)
    w2, s2, b2 = conv_bn(ks[4], ks[5], ks[6], ks[7], mid_channels, out_channels)
    return {"w1": w1, "scale1": s1, "bias1": b1,
            "w2": w2, "scale2": s2, "bias2": b2}


if __name__ == "__main__":
    in_channels, out_channels = 8, 4        # Up(8, 4, bilinear=True)
    N, H1, W1 = 2, 8, 8                     # x1: (N, in_ch//2, 8, 8)
    H2, W2 = 16, 16                         # x2: (N, in_ch//2, 16, 16)

    key = jax.random.PRNGKey(0)
    k_p, k_x1, k_x2 = jax.random.split(key, 3)

    params = make_params(k_p, in_channels, out_channels)
    x1 = jax.random.normal(k_x1, (N, in_channels // 2, H1, W1), jnp.float32)
    x2 = jax.random.normal(k_x2, (N, in_channels // 2, H2, W2), jnp.float32)

    out = jax.jit(functools.partial(up_forward, params))(x1, x2)
    out = jax.block_until_ready(out)
    assert out.shape == (N, out_channels, H2, W2), out.shape

    ref = jax.block_until_ready(_up_forward_ref(params, x1, x2))
    assert jnp.allclose(out, ref, atol=1e-4, rtol=1e-4), \
        float(jnp.max(jnp.abs(out - ref)))

    print("KERNEL_OK")
</pallas_src>

<mosaic_0001>
module attributes {stable_mosaic.version = 11 : i64} {
  func.func @_up_doubleconv_kernel(%arg0: i32, %arg1: memref<1x4x64xf32, #tpu.memory_space<vmem>>, %arg2: memref<1x4x256xf32, #tpu.memory_space<vmem>>, %arg3: memref<64x256xf32, #tpu.memory_space<vmem>>, %arg4: memref<1x256xi32, #tpu.memory_space<vmem>>, %arg5: memref<4x72xf32, #tpu.memory_space<vmem>>, %arg6: memref<4x1xf32, #tpu.memory_space<vmem>>, %arg7: memref<4x36xf32, #tpu.memory_space<vmem>>, %arg8: memref<4x1xf32, #tpu.memory_space<vmem>>, %arg9: memref<1x4x256xf32, #tpu.memory_space<vmem>>, %arg10: memref<8x512xf32, #tpu.memory_space<vmem>>, %arg11: memref<72x256xf32, #tpu.memory_space<vmem>>, %arg12: memref<4x512xf32, #tpu.memory_space<vmem>>, %arg13: memref<36x256xf32, #tpu.memory_space<vmem>>) attributes {dimension_semantics = [#tpu.dimension_semantics<parallel>], iteration_bounds = array<i64: 2>, scalar_prefetch = 0 : i64, scratch_operands = 4 : i64, tpu.core_type = #tpu.core_type<tc>, window_params = [{transform_indices = @transform_0, window_bounds = array<i64: 1, 4, 64>}, {transform_indices = @transform_1, window_bounds = array<i64: 1, 4, 256>}, {pipeline_mode = #tpu.pipeline_mode<synchronous>, transform_indices = @transform_2, window_bounds = array<i64: 64, 256>}, {pipeline_mode = #tpu.pipeline_mode<synchronous>, transform_indices = @transform_3, window_bounds = array<i64: 1, 256>}, {pipeline_mode = #tpu.pipeline_mode<synchronous>, transform_indices = @transform_4, window_bounds = array<i64: 4, 72>}, {pipeline_mode = #tpu.pipeline_mode<synchronous>, transform_indices = @transform_5, window_bounds = array<i64: 4, 1>}, {pipeline_mode = #tpu.pipeline_mode<synchronous>, transform_indices = @transform_6, window_bounds = array<i64: 4, 36>}, {pipeline_mode = #tpu.pipeline_mode<synchronous>, transform_indices = @transform_7, window_bounds = array<i64: 4, 1>}, {transform_indices = @transform_8, window_bounds = array<i64: 1, 4, 256>}]} {
    %c0 = arith.constant 0 : index
    %c0_0 = arith.constant 0 : index
    %0 = vector.load %arg4[%c0, %c0_0] : memref<1x256xi32, #tpu.memory_space<vmem>>, vector<1x256xi32>
    %c0_i32 = arith.constant 0 : i32
    %1 = vector.broadcast %c0_i32 : i32 to vector<1x256xi32>
    %2 = arith.cmpi sgt, %0, %1 : vector<1x256xi32>
    %c15_i32 = arith.constant 15 : i32
    %3 = vector.broadcast %c15_i32 : i32 to vector<1x256xi32>
    %4 = arith.cmpi slt, %0, %3 : vector<1x256xi32>
    %c0_1 = arith.constant 0 : index
    %c0_2 = arith.constant 0 : index
    %c0_3 = arith.constant 0 : index
    %5 = vector.load %arg1[%c0_1, %c0_2, %c0_3] : memref<1x4x64xf32, #tpu.memory_space<vmem>>, vector<1x4x64xf32>
    %6 = vector.shape_cast %5 : vector<1x4x64xf32> to vector<4x64xf32>
    %c0_4 = arith.constant 0 : index
    %c0_5 = arith.constant 0 : index
    %7 = vector.load %arg3[%c0_4, %c0_5] : memref<64x256xf32, #tpu.memory_space<vmem>>, vector<64x256xf32>
    %cst = arith.constant dense<0.000000e+00> : vector<4x256xf32>
    %8 = tpu.matmul %6, %7, %cst {dimension_numbers = #tpu.dot_dimension_numbers<[1], [0], [0], [1], [0, 0, 1, 1], [], []>} : vector<4x64xf32>, vector<64x256xf32>, vector<4x256xf32> -> vector<4x256xf32>
    %cst_6 = arith.constant 0.000000e+00 : f32
    %9 = vector.broadcast %cst_6 : f32 to vector<8x512xf32>
    %c0_7 = arith.constant 0 : index
    %c0_8 = arith.constant 0 : index
    %10 = vector.load %arg10[%c0_7, %c0_8] : memref<8x512xf32, #tpu.memory_space<vmem>>, vector<8x512xf32>
    tpu.vector_store %arg10[%c0_7, %c0_8], %9 {strides = array<i32>} : memref<8x512xf32, #tpu.memory_space<vmem>>, vector<8x512xf32>,
    %c0_9 = arith.constant 0 : index
    %c0_10 = arith.constant 0 : index
    %c0_11 = arith.constant 0 : index
    %11 = vector.load %arg2[%c0_9, %c0_10, %c0_11] : memref<1x4x256xf32, #tpu.memory_space<vmem>>, vector<1x4x256xf32>
    %12 = vector.shape_cast %11 : vector<1x4x256xf32> to vector<4x256xf32>
    %c0_12 = arith.constant 0 : index
    %c128 = arith.constant 128 : index
    %13 = vector.load %arg10[%c0_12, %c128] : memref<8x512xf32, #tpu.memory_space<vmem>>, vector<4x256xf32>
    tpu.vector_store %arg10[%c0_12, %c128], %12 {strides = array<i32>} : memref<8x512xf32, #tpu.memory_space<vmem>>, vector<4x256xf32>,
    %c4 = arith.constant 4 : index
    %c128_13 = arith.constant 128 : index
    %14 = vector.load %arg10[%c4, %c128_13] : memref<8x512xf32, #tpu.memory_space<vmem>>, vector<4x256xf32>
    tpu.vector_store %arg10[%c4, %c128_13], %8 {strides = array<i32>} : memref<8x512xf32, #tpu.memory_space<vmem>>, vector<4x256xf32>,
    %c0_14 = arith.constant 0 : index
    %c111 = arith.constant 111 : index
    %15 = vector.load %arg10[%c0_14, %c111] : memref<8x512xf32, #tpu.memory_space<vmem>>, vector<8x256xf32>
    %cst_15 = arith.constant 0.000000e+00 : f32
    %16 = vector.shape_cast %2 : vector<1x256xi1> to vector<1x256xi1>
    %17 = vector.broadcast %16 : vector<1x256xi1> to vector<8x256xi1>
    %18 = vector.broadcast %cst_15 : f32 to vector<8x256xf32>
    %19 = arith.select %17, %15, %18 : vector<8x256xi1>, vector<8x256xf32>
    %c0_16 = arith.constant 0 : index
    %c0_17 = arith.constant 0 : index
    %20 = vector.load %arg11[%c0_16, %c0_17] : memref<72x256xf32, #tpu.memory_space<vmem>>, vector<8x256xf32>
    tpu.vector_store %arg11[%c0_16, %c0_17], %19 {strides = array<i32>} : memref<72x256xf32, #tpu.memory_space<vmem>>, vector<8x256xf32>,
    %c0_18 = arith.constant 0 : index
    %c112 = arith.constant 112 : index
    %21 = vector.load %arg10[%c0_18, %c112] : memref<8x512xf32, #tpu.memory_space<vmem>>, vector<8x256xf32>
    %c8 = arith.constant 8 : index
    %c0_19 = arith.constant 0 : index
    %22 = vector.load %arg11[%c8, %c0_19] : memref<72x256xf32, #tpu.memory_space<vmem>>, vector<8x256xf32>
    tpu.vector_store %arg11[%c8, %c0_19], %21 {strides = array<i32>} : memref<72x256xf32, #tpu.memory_space<vmem>>, vector<8x256xf32>,
    %c0_20 = arith.constant 0 : index
    %c113 = arith.constant 113 : index
    %23 = vector.load %arg10[%c0_20, %c113] : memref<8x512xf32, #tpu.memory_space<vmem>>, vector<8x256xf32>
    %cst_21 = arith.constant 0.000000e+00 : f32
    %24 = vector.shape_cast %4 : vector<1x256xi1> to vector<1x256xi1>
    %25 = vector.broadcast %24 : vector<1x256xi1> to vector<8x256xi1>
    %26 = vector.broadcast %cst_21 : f32 to vector<8x256xf32>
    %27 = arith.select %25, %23, %26 : vector<8x256xi1>, vector<8x256xf32>
    %c16 = arith.constant 16 : index
    %c0_22 = arith.constant 0 : index
    %28 = vector.load %arg11[%c16, %c0_22] : memref<72x256xf32, #tpu.memory_space<vmem>>, vector<8x256xf32>
    tpu.vector_store %arg11[%c16, %c0_22], %27 {strides = array<i32>} : memref<72x256xf32, #tpu.memory_space<vmem>>, vector<8x256xf32>,
    %c0_23 = arith.constant 0 : index
    %c127 = arith.constant 127 : index
    %29 = vector.load %arg10[%c0_23, %c127] : memref<8x512xf32, #tpu.memory_space<vmem>>, vector<8x256xf32>
    %cst_24 = arith.constant 0.000000e+00 : f32
    %30 = vector.shape_cast %2 : vector<1x256xi1> to vector<1x256xi1>
    %31 = vector.broadcast %30 : vector<1x256xi1> to vector<8x256xi1>
    %32 = vector.broadcast %cst_24 : f32 to vector<8x256xf32>
    %33 = arith.select %31, %29, %32 : vector<8x256xi1>, vector<8x256xf32>
    %c24 = arith.constant 24 : index
    %c0_25 = arith.constant 0 : index
    %34 = vector.load %arg11[%c24, %c0_25] : memref<72x256xf32, #tpu.memory_space<vmem>>, vector<8x256xf32>
    tpu.vector_store %arg11[%c24, %c0_25], %33 {strides = array<i32>} : memref<72x256xf32, #tpu.memory_space<vmem>>, vector<8x256xf32>,
    %c0_26 = arith.constant 0 : index
    %c128_27 = arith.constant 128 : index
    %35 = vector.load %arg10[%c0_26, %c128_27] : memref<8x512xf32, #tpu.memory_space<vmem>>, vector<8x256xf32>
    %c32 = arith.constant 32 : index
    %c0_28 = arith.constant 0 : index
    %36 = vector.load %arg11[%c32, %c0_28] : memref<72x256xf32, #tpu.memory_space<vmem>>, vector<8x256xf32>
    tpu.vector_store %arg11[%c32, %c0_28], %35 {strides = array<i32>} : memref<72x256xf32, #tpu.memory_space<vmem>>, vector<8x256xf32>,
    %c0_29 = arith.constant 0 : index
    %c129 = arith.constant 129 : index
    %37 = vector.load %arg10[%c0_29, %c129] : memref<8x512xf32, #tpu.memory_space<vmem>>, vector<8x256xf32>
    %cst_30 = arith.constant 0.000000e+00 : f32
    %38 = vector.shape_cast %4 : vector<1x256xi1> to vector<1x256xi1>
    %39 = vector.broadcast %38 : vector<1x256xi1> to vector<8x256xi1>
    %40 = vector.broadcast %cst_30 : f32 to vector<8x256xf32>
    %41 = arith.select %39, %37, %40 : vector<8x256xi1>, vector<8x256xf32>
    %c40 = arith.constant 40 : index
    %c0_31 = arith.constant 0 : index
    %42 = vector.load %arg11[%c40, %c0_31] : memref<72x256xf32, #tpu.memory_space<vmem>>, vector<8x256xf32>
    tpu.vector_store %arg11[%c40, %c0_31], %41 {strides = array<i32>} : memref<72x256xf32, #tpu.memory_space<vmem>>, vector<8x256xf32>,
    %c0_32 = arith.constant 0 : index
    %c143 = arith.constant 143 : index
    %43 = vector.load %arg10[%c0_32, %c143] : memref<8x512xf32, #tpu.memory_space<vmem>>, vector<8x256xf32>
    %cst_33 = arith.constant 0.000000e+00 : f32
    %44 = vector.shape_cast %2 : vector<1x256xi1> to vector<1x256xi1>
    %45 = vector.broadcast %44 : vector<1x256xi1> to vector<8x256xi1>
    %46 = vector.broadcast %cst_33 : f32 to vector<8x256xf32>
    %47 = arith.select %45, %43, %46 : vector<8x256xi1>, vector<8x256xf32>
    %c48 = arith.constant 48 : index
    %c0_34 = arith.constant 0 : index
    %48 = vector.load %arg11[%c48, %c0_34] : memref<72x256xf32, #tpu.memory_space<vmem>>, vector<8x256xf32>
    tpu.vector_store %arg11[%c48, %c0_34], %47 {strides = array<i32>} : memref<72x256xf32, #tpu.memory_space<vmem>>, vector<8x256xf32>,
    %c0_35 = arith.constant 0 : index
    %c144 = arith.constant 144 : index
    %49 = vector.load %arg10[%c0_35, %c144] : memref<8x512xf32, #tpu.memory_space<vmem>>, vector<8x256xf32>
    %c56 = arith.constant 56 : index
    %c0_36 = arith.constant 0 : index
    %50 = vector.load %arg11[%c56, %c0_36] : memref<72x256xf32, #tpu.memory_space<vmem>>, vector<8x256xf32>
    tpu.vector_store %arg11[%c56, %c0_36], %49 {strides = array<i32>} : memref<72x256xf32, #tpu.memory_space<vmem>>, vector<8x256xf32>,
    %c0_37 = arith.constant 0 : index
    %c145 = arith.constant 145 : index
    %51 = vector.load %arg10[%c0_37, %c145] : memref<8x512xf32, #tpu.memory_space<vmem>>, vector<8x256xf32>
    %cst_38 = arith.constant 0.000000e+00 : f32
    %52 = vector.shape_cast %4 : vector<1x256xi1> to vector<1x256xi1>
    %53 = vector.broadcast %52 : vector<1x256xi1> to vector<8x256xi1>
    %54 = vector.broadcast %cst_38 : f32 to vector<8x256xf32>
    %55 = arith.select %53, %51, %54 : vector<8x256xi1>, vector<8x256xf32>
    %c64 = arith.constant 64 : index
    %c0_39 = arith.constant 0 : index
    %56 = vector.load %arg11[%c64, %c0_39] : memref<72x256xf32, #tpu.memory_space<vmem>>, vector<8x256xf32>
    tpu.vector_store %arg11[%c64, %c0_39], %55 {strides = array<i32>} : memref<72x256xf32, #tpu.memory_space<vmem>>, vector<8x256xf32>,
    %c0_40 = arith.constant 0 : index
    %c0_41 = arith.constant 0 : index
    %57 = vector.load %arg5[%c0_40, %c0_41] : memref<4x72xf32, #tpu.memory_space<vmem>>, vector<4x72xf32>
    %c0_42 = arith.constant 0 : index
    %c0_43 = arith.constant 0 : index
    %58 = vector.load %arg11[%c0_42, %c0_43] : memref<72x256xf32, #tpu.memory_space<vmem>>, vector<72x256xf32>
    %cst_44 = arith.constant dense<0.000000e+00> : vector<4x256xf32>
    %59 = tpu.matmul %57, %58, %cst_44 {dimension_numbers = #tpu.dot_dimension_numbers<[1], [0], [0], [1], [0, 0, 1, 1], [], []>} : vector<4x72xf32>, vector<72x256xf32>, vector<4x256xf32> -> vector<4x256xf32>
    %c0_45 = arith.constant 0 : index
    %c0_46 = arith.constant 0 : index
    %60 = vector.load %arg6[%c0_45, %c0_46] : memref<4x1xf32, #tpu.memory_space<vmem>>, vector<4x1xf32>
    %61 = vector.broadcast %60 : vector<4x1xf32> to vector<4x256xf32>
    %62 = arith.addf %59, %61 : vector<4x256xf32>
    %cst_47 = arith.constant 0.000000e+00 : f32
    %63 = vector.broadcast %cst_47 : f32 to vector<4x256xf32>
    %64 = arith.maximumf %62, %63 : vector<4x256xf32>
    %cst_48 = arith.constant 0.000000e+00 : f32
    %65 = vector.broadcast %cst_48 : f32 to vector<4x512xf32>
    %c0_49 = arith.constant 0 : index
    %c0_50 = arith.constant 0 : index
    %66 = vector.load %arg12[%c0_49, %c0_50] : memref<4x512xf32, #tpu.memory_space<vmem>>, vector<4x512xf32>
    tpu.vector_store %arg12[%c0_49, %c0_50], %65 {strides = array<i32>} : memref<4x512xf32, #tpu.memory_space<vmem>>, vector<4x512xf32>,
    %c0_51 = arith.constant 0 : index
    %c128_52 = arith.constant 128 : index
    %67 = vector.load %arg12[%c0_51, %c128_52] : memref<4x512xf32, #tpu.memory_space<vmem>>, vector<4x256xf32>
    tpu.vector_store %arg12[%c0_51, %c128_52], %64 {strides = array<i32>} : memref<4x512xf32, #tpu.memory_space<vmem>>, vector<4x256xf32>,
    %c0_53 = arith.constant 0 : index
    %c111_54 = arith.constant 111 : index
    %68 = vector.load %arg12[%c0_53, %c111_54] : memref<4x512xf32, #tpu.memory_space<vmem>>, vector<4x256xf32>
    %cst_55 = arith.constant 0.000000e+00 : f32
    %69 = vector.shape_cast %2 : vector<1x256xi1> to vector<1x256xi1>
    %70 = vector.broadcast %69 : vector<1x256xi1> to vector<4x256xi1>
    %71 = vector.broadcast %cst_55 : f32 to vector<4x256xf32>
    %72 = arith.select %70, %68, %71 : vector<4x256xi1>, vector<4x256xf32>
    %c0_56 = arith.constant 0 : index
    %c0_57 = arith.constant 0 : index
    %73 = vector.load %arg13[%c0_56, %c0_57] : memref<36x256xf32, #tpu.memory_space<vmem>>, vector<4x256xf32>
    tpu.vector_store %arg13[%c0_56, %c0_57], %72 {strides = array<i32>} : memref<36x256xf32, #tpu.memory_space<vmem>>, vector<4x256xf32>,
    %c0_58 = arith.constant 0 : index
    %c112_59 = arith.constant 112 : index
    %74 = vector.load %arg12[%c0_58, %c112_59] : memref<4x512xf32, #tpu.memory_space<vmem>>, vector<4x256xf32>
    %c4_60 = arith.constant 4 : index
    %c0_61 = arith.constant 0 : index
    %75 = vector.load %arg13[%c4_60, %c0_61] : memref<36x256xf32, #tpu.memory_space<vmem>>, vector<4x256xf32>
    tpu.vector_store %arg13[%c4_60, %c0_61], %74 {strides = array<i32>} : memref<36x256xf32, #tpu.memory_space<vmem>>, vector<4x256xf32>,
    %c0_62 = arith.constant 0 : index
    %c113_63 = arith.constant 113 : index
    %76 = vector.load %arg12[%c0_62, %c113_63] : memref<4x512xf32, #tpu.memory_space<vmem>>, vector<4x256xf32>
    %cst_64 = arith.constant 0.000000e+00 : f32
    %77 = vector.shape_cast %4 : vector<1x256xi1> to vector<1x256xi1>
    %78 = vector.broadcast %77 : vector<1x256xi1> to vector<4x256xi1>
    %79 = vector.broadcast %cst_64 : f32 to vector<4x256xf32>
    %80 = arith.select %78, %76, %79 : vector<4x256xi1>, vector<4x256xf32>
    %c8_65 = arith.constant 8 : index
    %c0_66 = arith.constant 0 : index
    %81 = vector.load %arg13[%c8_65, %c0_66] : memref<36x256xf32, #tpu.memory_space<vmem>>, vector<4x256xf32>
    tpu.vector_store %arg13[%c8_65, %c0_66], %80 {strides = array<i32>} : memref<36x256xf32, #tpu.memory_space<vmem>>, vector<4x256xf32>,
    %c0_67 = arith.constant 0 : index
    %c127_68 = arith.constant 127 : index
    %82 = vector.load %arg12[%c0_67, %c127_68] : memref<4x512xf32, #tpu.memory_space<vmem>>, vector<4x256xf32>
    %cst_69 = arith.constant 0.000000e+00 : f32
    %83 = vector.shape_cast %2 : vector<1x256xi1> to vector<1x256xi1>
    %84 = vector.broadcast %83 : vector<1x256xi1> to vector<4x256xi1>
    %85 = vector.broadcast %cst_69 : f32 to vector<4x256xf32>
    %86 = arith.select %84, %82, %85 : vector<4x256xi1>, vector<4x256xf32>
    %c12 = arith.constant 12 : index
    %c0_70 = arith.constant 0 : index
    %87 = vector.load %arg13[%c12, %c0_70] : memref<36x256xf32, #tpu.memory_space<vmem>>, vector<4x256xf32>
    tpu.vector_store %arg13[%c12, %c0_70], %86 {strides = array<i32>} : memref<36x256xf32, #tpu.memory_space<vmem>>, vector<4x256xf32>,
    %c0_71 = arith.constant 0 : index
    %c128_72 = arith.constant 128 : index
    %88 = vector.load %arg12[%c0_71, %c128_72] : memref<4x512xf32, #tpu.memory_space<vmem>>, vector<4x256xf32>
    %c16_73 = arith.constant 16 : index
    %c0_74 = arith.constant 0 : index
    %89 = vector.load %arg13[%c16_73, %c0_74] : memref<36x256xf32, #tpu.memory_space<vmem>>, vector<4x256xf32>
    tpu.vector_store %arg13[%c16_73, %c0_74], %88 {strides = array<i32>} : memref<36x256xf32, #tpu.memory_space<vmem>>, vector<4x256xf32>,
    %c0_75 = arith.constant 0 : index
    %c129_76 = arith.constant 129 : index
    %90 = vector.load %arg12[%c0_75, %c129_76] : memref<4x512xf32, #tpu.memory_space<vmem>>, vector<4x256xf32>
    %cst_77 = arith.constant 0.000000e+00 : f32
    %91 = vector.shape_cast %4 : vector<1x256xi1> to vector<1x256xi1>
    %92 = vector.broadcast %91 : vector<1x256xi1> to vector<4x256xi1>
    %93 = vector.broadcast %cst_77 : f32 to vector<4x256xf32>
    %94 = arith.select %92, %90, %93 : vector<4x256xi1>, vector<4x256xf32>
    %c20 = arith.constant 20 : index
    %c0_78 = arith.constant 0 : index
    %95 = vector.load %arg13[%c20, %c0_78] : memref<36x256xf32, #tpu.memory_space<vmem>>, vector<4x256xf32>
    tpu.vector_store %arg13[%c20, %c0_78], %94 {strides = array<i32>} : memref<36x256xf32, #tpu.memory_space<vmem>>, vector<4x256xf32>,
    %c0_79 = arith.constant 0 : index
    %c143_80 = arith.constant 143 : index
    %96 = vector.load %arg12[%c0_79, %c143_80] : memref<4x512xf32, #tpu.memory_space<vmem>>, vector<4x256xf32>
    %cst_81 = arith.constant 0.000000e+00 : f32
    %97 = vector.shape_cast %2 : vector<1x256xi1> to vector<1x256xi1>
    %98 = vector.broadcast %97 : vector<1x256xi1> to vector<4x256xi1>
    %99 = vector.broadcast %cst_81 : f32 to vector<4x256xf32>
    %100 = arith.select %98, %96, %99 : vector<4x256xi1>, vector<4x256xf32>
    %c24_82 = arith.constant 24 : index
    %c0_83 = arith.constant 0 : index
    %101 = vector.load %arg13[%c24_82, %c0_83] : memref<36x256xf32, #tpu.memory_space<vmem>>, vector<4x256xf32>
    tpu.vector_store %arg13[%c24_82, %c0_83], %100 {strides = array<i32>} : memref<36x256xf32, #tpu.memory_space<vmem>>, vector<4x256xf32>,
    %c0_84 = arith.constant 0 : index
    %c144_85 = arith.constant 144 : index
    %102 = vector.load %arg12[%c0_84, %c144_85] : memref<4x512xf32, #tpu.memory_space<vmem>>, vector<4x256xf32>
    %c28 = arith.constant 28 : index
    %c0_86 = arith.constant 0 : index
    %103 = vector.load %arg13[%c28, %c0_86] : memref<36x256xf32, #tpu.memory_space<vmem>>, vector<4x256xf32>
    tpu.vector_store %arg13[%c28, %c0_86], %102 {strides = array<i32>} : memref<36x256xf32, #tpu.memory_space<vmem>>, vector<4x256xf32>,
    %c0_87 = arith.constant 0 : index
    %c145_88 = arith.constant 145 : index
    %104 = vector.load %arg12[%c0_87, %c145_88] : memref<4x512xf32, #tpu.memory_space<vmem>>, vector<4x256xf32>
    %cst_89 = arith.constant 0.000000e+00 : f32
    %105 = vector.shape_cast %4 : vector<1x256xi1> to vector<1x256xi1>
    %106 = vector.broadcast %105 : vector<1x256xi1> to vector<4x256xi1>
    %107 = vector.broadcast %cst_89 : f32 to vector<4x256xf32>
    %108 = arith.select %106, %104, %107 : vector<4x256xi1>, vector<4x256xf32>
    %c32_90 = arith.constant 32 : index
    %c0_91 = arith.constant 0 : index
    %109 = vector.load %arg13[%c32_90, %c0_91] : memref<36x256xf32, #tpu.memory_space<vmem>>, vector<4x256xf32>
    tpu.vector_store %arg13[%c32_90, %c0_91], %108 {strides = array<i32>} : memref<36x256xf32, #tpu.memory_space<vmem>>, vector<4x256xf32>,
    %c0_92 = arith.constant 0 : index
    %c0_93 = arith.constant 0 : index
    %110 = vector.load %arg7[%c0_92, %c0_93] : memref<4x36xf32, #tpu.memory_space<vmem>>, vector<4x36xf32>
    %c0_94 = arith.constant 0 : index
    %c0_95 = arith.constant 0 : index
    %111 = vector.load %arg13[%c0_94, %c0_95] : memref<36x256xf32, #tpu.memory_space<vmem>>, vector<36x256xf32>
    %cst_96 = arith.constant dense<0.000000e+00> : vector<4x256xf32>
    %112 = tpu.matmul %110, %111, %cst_96 {dimension_numbers = #tpu.dot_dimension_numbers<[1], [0], [0], [1], [0, 0, 1, 1], [], []>} : vector<4x36xf32>, vector<36x256xf32>, vector<4x256xf32> -> vector<4x256xf32>
    %c0_97 = arith.constant 0 : index
    %c0_98 = arith.constant 0 : index
    %113 = vector.load %arg8[%c0_97, %c0_98] : memref<4x1xf32, #tpu.memory_space<vmem>>, vector<4x1xf32>
    %114 = vector.broadcast %113 : vector<4x1xf32> to vector<4x256xf32>
    %115 = arith.addf %112, %114 : vector<4x256xf32>
    %cst_99 = arith.constant 0.000000e+00 : f32
    %116 = vector.broadcast %cst_99 : f32 to vector<4x256xf32>
    %117 = arith.maximumf %115, %116 : vector<4x256xf32>
    %c0_100 = arith.constant 0 : index
    %c0_101 = arith.constant 0 : index
    %c0_102 = arith.constant 0 : index
    %118 = vector.load %arg9[%c0_100, %c0_101, %c0_102] : memref<1x4x256xf32, #tpu.memory_space<vmem>>, vector<1x4x256xf32>
    %119 = vector.shape_cast %118 : vector<1x4x256xf32> to vector<4x256xf32>
    %120 = vector.shape_cast %117 : vector<4x256xf32> to vector<1x4x256xf32>
    tpu.vector_store %arg9[%c0_100, %c0_101, %c0_102], %120 {strides = array<i32>} : memref<1x4x256xf32, #tpu.memory_space<vmem>>, vector<1x4x256xf32>,
    return
  }
  func.func @transform_0(%arg0: i32) -> (i32, i32, i32) {
    %c0_i32 = arith.constant 0 : i32
    %c0_i32_0 = arith.constant 0 : i32
    %c0_i32_1 = arith.constant 0 : i32
    return %arg0, %c0_i32, %c0_i32_0 : i32, i32, i32
  }
  func.func @transform_1(%arg0: i32) -> (i32, i32, i32) {
    %c0_i32 = arith.constant 0 : i32
    %c0_i32_0 = arith.constant 0 : i32
    %c0_i32_1 = arith.constant 0 : i32
    return %arg0, %c0_i32, %c0_i32_0 : i32, i32, i32
  }
  func.func @transform_2(%arg0: i32) -> (i32, i32) {
    %c0_i32 = arith.constant 0 : i32
    %c0_i32_0 = arith.constant 0 : i32
    %c0_i32_1 = arith.constant 0 : i32
    return %c0_i32, %c0_i32_0 : i32, i32
  }
  func.func @transform_3(%arg0: i32) -> (i32, i32) {
    %c0_i32 = arith.constant 0 : i32
    %c0_i32_0 = arith.constant 0 : i32
    %c0_i32_1 = arith.constant 0 : i32
    return %c0_i32, %c0_i32_0 : i32, i32
  }
  func.func @transform_4(%arg0: i32) -> (i32, i32) {
    %c0_i32 = arith.constant 0 : i32
    %c0_i32_0 = arith.constant 0 : i32
    %c0_i32_1 = arith.constant 0 : i32
    return %c0_i32, %c0_i32_0 : i32, i32
  }
  func.func @transform_5(%arg0: i32) -> (i32, i32) {
    %c0_i32 = arith.constant 0 : i32
    %c0_i32_0 = arith.constant 0 : i32
    %c0_i32_1 = arith.constant 0 : i32
    return %c0_i32, %c0_i32_0 : i32, i32
  }
  func.func @transform_6(%arg0: i32) -> (i32, i32) {
    %c0_i32 = arith.constant 0 : i32
    %c0_i32_0 = arith.constant 0 : i32
    %c0_i32_1 = arith.constant 0 : i32
    return %c0_i32, %c0_i32_0 : i32, i32
  }
  func.func @transform_7(%arg0: i32) -> (i32, i32) {
    %c0_i32 = arith.constant 0 : i32
    %c0_i32_0 = arith.constant 0 : i32
    %c0_i32_1 = arith.constant 0 : i32
    return %c0_i32, %c0_i32_0 : i32, i32
  }
  func.func @transform_8(%arg0: i32) -> (i32, i32, i32) {
    %c0_i32 = arith.constant 0 : i32
    %c0_i32_0 = arith.constant 0 : i32
    %c0_i32_1 = arith.constant 0 : i32
    return %arg0, %c0_i32, %c0_i32_0 : i32, i32, i32
  }
}

</mosaic_0001>

<llo_original>
// kernel: up_forward.1
$region0: #{up_forward.1}
  #allocation0 [shape = 'u32[]', space=smem, size = 0x4, offset = 0x4, fixed_abs, tag = 'smem constant byte address 0x4 - core index']
  #allocation1 [shape = 'u32[72,128]{1,0:T(1,128)}', space=vmem, size = 0x9000, scoped, tag = 'internal scratch']
  #allocation2 [shape = 'f32[8,512]{1,0:T(8,128)}', space=vmem, size = 0x4000, scoped, tag = 'scratch operand']
  #allocation3 [shape = 'f32[72,256]{1,0:T(8,128)}', space=vmem, size = 0x12000, scoped, tag = 'scratch operand']
  #allocation4 [shape = 'f32[4,512]{1,0:T(4,128)}', space=vmem, size = 0x2000, scoped, tag = 'scratch operand']
  #allocation5 [shape = 'f32[36,256]{1,0:T(8,128)}', space=vmem, size = 0xa000, scoped, tag = 'scratch operand']
  %s0 = inlined_call_operand.vmem [shape: f32[2,4,64], index: 0, kind: input, shape index: {}]
  %s1 = inlined_call_operand.vmem [shape: f32[2,4,256], index: 1, kind: input, shape index: {}]
  %s2 = inlined_call_operand.vmem [shape: f32[64,256], index: 2, kind: input, shape index: {}]
  %s3 = inlined_call_operand.vmem [shape: s32[1,256], index: 3, kind: input, shape index: {}]
  %s4 = inlined_call_operand.vmem [shape: f32[4,72], index: 4, kind: input, shape index: {}]
  %s5 = inlined_call_operand.vmem [shape: f32[4,1], index: 5, kind: input, shape index: {}]
  %s6 = inlined_call_operand.vmem [shape: f32[4,36], index: 6, kind: input, shape index: {}]
  %s7 = inlined_call_operand.vmem [shape: f32[4,1], index: 7, kind: input, shape index: {}]
  %s8 = inlined_call_operand.vmem [shape: f32[2,4,256], index: 8, kind: output, shape index: {}]
  %s9 = sld [smem:[#allocation0]]
  $region65: #{up_forward.1} parent=0
    _
  %s11 = ssub.s32 1, %s9
  %s12 = scalar_select 0, %s11, %s9
  loop: start=0, step=1, limit=4
  $region2: #{up_forward.1} parent=0 // loop_pre_header
    _
  $region3: #{up_forward.1} parent=0 // loop_header
    %s14 = sphi 0, %s18
    %p15 = scmp.ge.s32.totalorder %s14, 4
    %s24 = sphi 0, %s26
    %s27 = sphi 0, %s24
    %s28 = sphi 0, %s27
    %s44 = sphi 0, %s28
    %s50 = sphi 0, %s52
    %s53 = sphi 0, %s50
    %s54 = sphi 0, %s53
    %s70 = sphi 0, %s54
    %s74 = sphi 0, %s74
    %s76 = sphi 0, %s74
    %s77 = sphi 0, %s76
    %s91 = sphi 0, %s77
    %s95 = sphi 0, %s95
    %s97 = sphi 0, %s95
    %s98 = sphi 0, %s97
    %s112 = sphi 0, %s98
    %s116 = sphi 0, %s116
    %s118 = sphi 0, %s116
    %s119 = sphi 0, %s118
    %s133 = sphi 0, %s119
    %s137 = sphi 0, %s137
    %s139 = sphi 0, %s137
    %s140 = sphi 0, %s139
    %s154 = sphi 0, %s140
    %s158 = sphi 0, %s158
    %s160 = sphi 0, %s158
    %s161 = sphi 0, %s160
    %s175 = sphi 0, %s161
    %s179 = sphi 0, %s179
    %s181 = sphi 0, %s179
    %s182 = sphi 0, %s181
    %s196 = sphi 0, %s182
    %s202 = sphi 0, %s204
    %s205 = sphi 0, %s202
    %s206 = sphi 0, %s205
    %s222 = sphi 0, %s206
  $region4: #{up_forward.1} parent=0 // loop_header_branch
    %17 = sbr.rel (%p15) target = $region8
  $region5: #{up_forward.1} parent=0 // loop_body
    %s19 = ssub.s32 %s14, 1
    %s20 = ssub.s32 %s14, 2
    %s21 = sadd.s32 %s14, 1
    %s22 = ssub.s32 %s14, %s21
    %p23 = scmp.eq.s32.totalorder %s22, 0
    %s25 = sadd.s32 %s24, 1
    %s26 = scalar_select %p23, %s24, %s25
    %p29 = pneg %p23
    %p30 = scmp.eq.s32.totalorder %s14, 1
    %p31 = por %p29, %p30
    %p32 = scmp.ne.s32.totalorder %s24, %s27
    %p33 = scmp.eq.s32.totalorder %s14, 0
    %p34 = por %p32, %p33
    %p35 = scmp.ne.s32.totalorder %s24, %s27
    %p36 = scmp.eq.s32.totalorder %s19, 1
    %p37 = por %p35, %p36
    %p38 = scmp.ne.s32.totalorder %s27, %s28
    %p39 = scmp.eq.s32.totalorder %s19, 0
    %p40 = por %p38, %p39
    %p41 = scmp.ne.s32.totalorder %s27, %s28
    %p42 = scmp.eq.s32.totalorder %s20, 1
    %p43 = por %p41, %p42
    %p45 = scmp.ne.s32.totalorder %s28, %s44
    %p46 = scmp.eq.s32.totalorder %s20, 0
    %p47 = por %p45, %p46
    %s48 = ssub.s32 %s14, %s21
    %p49 = scmp.eq.s32.totalorder %s48, 0
    %s51 = sadd.s32 %s50, 1
    %s52 = scalar_select %p49, %s50, %s51
    %p55 = pneg %p49
    %p56 = scmp.eq.s32.totalorder %s14, 1
    %p57 = por %p55, %p56
    %p58 = scmp.ne.s32.totalorder %s50, %s53
    %p59 = scmp.eq.s32.totalorder %s14, 0
    %p60 = por %p58, %p59
    %p61 = scmp.ne.s32.totalorder %s50, %s53
    %p62 = scmp.eq.s32.totalorder %s19, 1
    %p63 = por %p61, %p62
    %p64 = scmp.ne.s32.totalorder %s53, %s54
    %p65 = scmp.eq.s32.totalorder %s19, 0
    %p66 = por %p64, %p65
    %p67 = scmp.ne.s32.totalorder %s53, %s54
    %p68 = scmp.eq.s32.totalorder %s20, 1
    %p69 = por %p67, %p68
    %p71 = scmp.ne.s32.totalorder %s54, %s70
    %p72 = scmp.eq.s32.totalorder %s20, 0
    %p73 = por %p71, %p72
    %s75 = sadd.s32 %s74, 1
    %p78 = scmp.eq.s32.totalorder %s14, 1
    %p79 = scmp.ne.s32.totalorder %s74, %s76
    %p80 = scmp.eq.s32.totalorder %s14, 0
    %p81 = por %p79, %p80
    %p82 = scmp.ne.s32.totalorder %s74, %s76
    %p83 = scmp.eq.s32.totalorder %s19, 1
    %p84 = por %p82, %p83
    %p85 = scmp.ne.s32.totalorder %s76, %s77
    %p86 = scmp.eq.s32.totalorder %s19, 0
    %p87 = por %p85, %p86
    %p88 = scmp.ne.s32.totalorder %s76, %s77
    %p89 = scmp.eq.s32.totalorder %s20, 1
    %p90 = por %p88, %p89
    %p92 = scmp.ne.s32.totalorder %s77, %s91
    %p93 = scmp.eq.s32.totalorder %s20, 0
    %p94 = por %p92, %p93
    %s96 = sadd.s32 %s95, 1
    %p99 = scmp.eq.s32.totalorder %s14, 1
    %p100 = scmp.ne.s32.totalorder %s95, %s97
    %p101 = scmp.eq.s32.totalorder %s14, 0
    %p102 = por %p100, %p101
    %p103 = scmp.ne.s32.totalorder %s95, %s97
    %p104 = scmp.eq.s32.totalorder %s19, 1
    %p105 = por %p103, %p104
    %p106 = scmp.ne.s32.totalorder %s97, %s98
    %p107 = scmp.eq.s32.totalorder %s19, 0
    %p108 = por %p106, %p107
    %p109 = scmp.ne.s32.totalorder %s97, %s98
    %p110 = scmp.eq.s32.totalorder %s20, 1
    %p111 = por %p109, %p110
    %p113 = scmp.ne.s32.totalorder %s98, %s112
    %p114 = scmp.eq.s32.totalorder %s20, 0
    %p115 = por %p113, %p114
    %s117 = sadd.s32 %s116, 1
    %p120 = scmp.eq.s32.totalorder %s14, 1
    %p121 = scmp.ne.s32.totalorder %s116, %s118
    %p122 = scmp.eq.s32.totalorder %s14, 0
    %p123 = por %p121, %p122
    %p124 = scmp.ne.s32.totalorder %s116, %s118
    %p125 = scmp.eq.s32.totalorder %s19, 1
    %p126 = por %p124, %p125
    %p127 = scmp.ne.s32.totalorder %s118, %s119
    %p128 = scmp.eq.s32.totalorder %s19, 0
    %p129 = por %p127, %p128
    %p130 = scmp.ne.s32.totalorder %s118, %s119
    %p131 = scmp.eq.s32.totalorder %s20, 1
    %p132 = por %p130, %p131
    %p134 = scmp.ne.s32.totalorder %s119, %s133
    %p135 = scmp.eq.s32.totalorder %s20, 0
    %p136 = por %p134, %p135
    %s138 = sadd.s32 %s137, 1
    %p141 = scmp.eq.s32.totalorder %s14, 1
    %p142 = scmp.ne.s32.totalorder %s137, %s139
    %p143 = scmp.eq.s32.totalorder %s14, 0
    %p144 = por %p142, %p143
    %p145 = scmp.ne.s32.totalorder %s137, %s139
    %p146 = scmp.eq.s32.totalorder %s19, 1
    %p147 = por %p145, %p146
    %p148 = scmp.ne.s32.totalorder %s139, %s140
    %p149 = scmp.eq.s32.totalorder %s19, 0
    %p150 = por %p148, %p149
    %p151 = scmp.ne.s32.totalorder %s139, %s140
    %p152 = scmp.eq.s32.totalorder %s20, 1
    %p153 = por %p151, %p152
    %p155 = scmp.ne.s32.totalorder %s140, %s154
    %p156 = scmp.eq.s32.totalorder %s20, 0
    %p157 = por %p155, %p156
    %s159 = sadd.s32 %s158, 1
    %p162 = scmp.eq.s32.totalorder %s14, 1
    %p163 = scmp.ne.s32.totalorder %s158, %s160
    %p164 = scmp.eq.s32.totalorder %s14, 0
    %p165 = por %p163, %p164
    %p166 = scmp.ne.s32.totalorder %s158, %s160
    %p167 = scmp.eq.s32.totalorder %s19, 1
    %p168 = por %p166, %p167
    %p169 = scmp.ne.s32.totalorder %s160, %s161
    %p170 = scmp.eq.s32.totalorder %s19, 0
    %p171 = por %p169, %p170
    %p172 = scmp.ne.s32.totalorder %s160, %s161
    %p173 = scmp.eq.s32.totalorder %s20, 1
    %p174 = por %p172, %p173
    %p176 = scmp.ne.s32.totalorder %s161, %s175
    %p177 = scmp.eq.s32.totalorder %s20, 0
    %p178 = por %p176, %p177
    %s180 = sadd.s32 %s179, 1
    %p183 = scmp.eq.s32.totalorder %s14, 1
    %p184 = scmp.ne.s32.totalorder %s179, %s181
    %p185 = scmp.eq.s32.totalorder %s14, 0
    %p186 = por %p184, %p185
    %p187 = scmp.ne.s32.totalorder %s179, %s181
    %p188 = scmp.eq.s32.totalorder %s19, 1
    %p189 = por %p187, %p188
    %p190 = scmp.ne.s32.totalorder %s181, %s182
    %p191 = scmp.eq.s32.totalorder %s19, 0
    %p192 = por %p190, %p191
    %p193 = scmp.ne.s32.totalorder %s181, %s182
    %p194 = scmp.eq.s32.totalorder %s20, 1
    %p195 = por %p193, %p194
    %p197 = scmp.ne.s32.totalorder %s182, %s196
    %p198 = scmp.eq.s32.totalorder %s20, 0
    %p199 = por %p197, %p198
    %s200 = ssub.s32 %s14, %s21
    %p201 = scmp.eq.s32.totalorder %s200, 0
    %s203 = sadd.s32 %s202, 1
    %s204 = scalar_select %p201, %s202, %s203
    %p207 = pneg %p201
    %p208 = scmp.eq.s32.totalorder %s14, 1
    %p209 = por %p207, %p208
    %p210 = scmp.ne.s32.totalorder %s202, %s205
    %p211 = scmp.eq.s32.totalorder %s14, 0
    %p212 = por %p210, %p211
    %p213 = scmp.ne.s32.totalorder %s202, %s205
    %p214 = scmp.eq.s32.totalorder %s19, 1
    %p215 = por %p213, %p214
    %p216 = scmp.ne.s32.totalorder %s205, %s206
    %p217 = scmp.eq.s32.totalorder %s19, 0
    %p218 = por %p216, %p217
    %p219 = scmp.ne.s32.totalorder %s205, %s206
    %p220 = scmp.eq.s32.totalorder %s20, 1
    %p221 = por %p219, %p220
    %p223 = scmp.ne.s32.totalorder %s206, %s222
    %p224 = scmp.eq.s32.totalorder %s20, 0
    %p225 = por %p223, %p224
    %p226 = scmp.le.s32.totalorder 1, %s14
    %p227 = scmp.lt.s32.totalorder %s14, 3
    %p228 = pnand %p226, %p227
    %p229 = pneg %p228
    // Predicated region
    $region9: #{up_forward.1} parent=5 // pred_check
      _
    $region10: #{up_forward.1} parent=5 // pred_check_branch
      %231 = sbr.rel (%p228) target = $region12
    $region11: #{up_forward.1} parent=5 // pred_region
      %s232 = ssub.s32 %s14, 1
      // Predicated region
      $region13: #{up_forward.1} parent=11 // pred_check
        %p233 = pneg %p87
      $region14: #{up_forward.1} parent=11 // pred_check_branch
        %235 = sbr.rel (%p233) target = $region16
      $region15: #{up_forward.1} parent=11 // pred_region
        _
      $region16: #{up_forward.1} parent=11 // pred_fallthru
        _
      // Predicated region
      $region17: #{up_forward.1} parent=11 // pred_check
        %p236 = pneg %p108
      $region18: #{up_forward.1} parent=11 // pred_check_branch
        %238 = sbr.rel (%p236) target = $region20
      $region19: #{up_forward.1} parent=11 // pred_region
        _
      $region20: #{up_forward.1} parent=11 // pred_fallthru
        _
      // Predicated region
      $region21: #{up_forward.1} parent=11 // pred_check
        %p239 = pneg %p129
      $region22: #{up_forward.1} parent=11 // pred_check_branch
        %241 = sbr.rel (%p239) target = $region24
      $region23: #{up_forward.1} parent=11 // pred_region
        _
      $region24: #{up_forward.1} parent=11 // pred_fallthru
        _
      // Predicated region
      $region25: #{up_forward.1} parent=11 // pred_check
        %p242 = pneg %p150
      $region26: #{up_forward.1} parent=11 // pred_check_branch
        %244 = sbr.rel (%p242) target = $region28
      $region27: #{up_forward.1} parent=11 // pred_region
        _
      $region28: #{up_forward.1} parent=11 // pred_fallthru
        _
      // Predicated region
      $region29: #{up_forward.1} parent=11 // pred_check
        %p245 = pneg %p171
      $region30: #{up_forward.1} parent=11 // pred_check_branch
        %247 = sbr.rel (%p245) target = $region32
      $region31: #{up_forward.1} parent=11 // pred_region
        _
      $region32: #{up_forward.1} parent=11 // pred_fallthru
        _
      // Predicated region
      $region33: #{up_forward.1} parent=11 // pred_check
        %p248 = pneg %p192
      $region34: #{up_forward.1} parent=11 // pred_check_branch
        %250 = sbr.rel (%p248) target = $region36
      $region35: #{up_forward.1} parent=11 // pred_region
        _
      $region36: #{up_forward.1} parent=11 // pred_fallthru
        _
    $region12: #{up_forward.1} parent=5 // pred_fallthru
      _
    %p251 = scmp.lt.s32.totalorder %s14, 2
    // Predicated region
    $region37: #{up_forward.1} parent=5 // pred_check
      %p252 = pneg %p251
    $region38: #{up_forward.1} parent=5 // pred_check_branch
      %254 = sbr.rel (%p252) target = $region40
    $region39: #{up_forward.1} parent=5 // pred_region
      // Predicated region
      $region41: #{up_forward.1} parent=39 // pred_check
        %p255 = pneg %p34
      $region42: #{up_forward.1} parent=39 // pred_check_branch
        %257 = sbr.rel (%p255) target = $region44
      $region43: #{up_forward.1} parent=39 // pred_region
        %p258 = scmp.lt.s32.totalorder %s14, 1
        %s259 = scalar_select %p258, %s14, 1
        %s260 = smul.addr %s259, 4
        %s261 = scalar_lea.vmem %s0, %s260
      $region44: #{up_forward.1} parent=39 // pred_fallthru
        _
      // Predicated region
      $region45: #{up_forward.1} parent=39 // pred_check
        %p262 = pneg %p60
      $region46: #{up_forward.1} parent=39 // pred_check_branch
        %264 = sbr.rel (%p262) target = $region48
      $region47: #{up_forward.1} parent=39 // pred_region
        %p265 = scmp.lt.s32.totalorder %s14, 1
        %s266 = scalar_select %p265, %s14, 1
        %s267 = smul.addr %s266, 2
        %s268 = smul.addr %s267, 4
        %s269 = scalar_lea.vmem %s1, %s268
      $region48: #{up_forward.1} parent=39 // pred_fallthru
        _
    $region40: #{up_forward.1} parent=5 // pred_fallthru
      _
    %p270 = scmp.le.s32.totalorder 1, %s14
    %p271 = scmp.lt.s32.totalorder %s14, 3
    %p272 = pnand %p270, %p271
    %p273 = pneg %p272
    // Predicated region
    $region49: #{up_forward.1} parent=5 // pred_check
      _
    $region50: #{up_forward.1} parent=5 // pred_check_branch
      %275 = sbr.rel (%p272) target = $region52
    $region51: #{up_forward.1} parent=5 // pred_region
      %s276 = ssub.s32 %s14, 1
      %p277 = scmp.lt.s32.totalorder %s19, 1
      %s278 = scalar_select %p277, %s19, 1
      %s279 = smul.addr %s278, 4
      %s280 = scalar_lea.vmem %s0, %s279
      %p281 = pneg %p40
      %p282 = pneg %p37
      %p283 = scmp.lt.s32.totalorder %s19, 1
      %s284 = scalar_select %p283, %s19, 1
      %s285 = smul.addr %s284, 2
      %s286 = smul.addr %s285, 4
      %s287 = scalar_lea.vmem %s1, %s286
      %p288 = pneg %p66
      %p289 = pneg %p63
      %p290 = pneg %p87
      %p291 = pneg %p84
      %p292 = pneg %p108
      %p293 = pneg %p105
      %p294 = pneg %p129
      %p295 = pneg %p126
      %p296 = pneg %p150
      %p297 = pneg %p147
      %p298 = pneg %p171
      %p299 = pneg %p168
      %p300 = pneg %p192
      %p301 = pneg %p189
      %p302 = pneg %p218
      %p303 = pneg %p215
      %p304 = scmp.lt.s32.totalorder %s19, 1
      %s305 = scalar_select %p304, %s19, 1
      %s306 = smul.addr %s305, 2
      %s307 = smul.addr %s306, 4
      %s308 = scalar_lea.vmem %s8, %s307
      %p309 = scmp.lt.s32.totalorder %s19, 1
      %s310 = scalar_select %p309, %s19, 1
      %s311 = smul.addr %s310, 4
      %s312 = scalar_lea.vmem %s0, %s311
      %p313 = scmp.lt.s32.totalorder %s19, 1
      %s314 = scalar_select %p313, %s19, 1
      %s315 = smul.addr %s314, 2
      %s316 = smul.addr %s315, 4
      %s317 = scalar_lea.vmem %s1, %s316
      %p318 = scmp.lt.s32.totalorder %s19, 1
      %s319 = scalar_select %p318, %s19, 1
      %s320 = smul.addr %s319, 2
      %s321 = smul.addr %s320, 4
      %s322 = scalar_lea.vmem %s8, %s321
      %v323 = vld [vmem:[%s3] sm:$0x3]
      %vm324 = vcmp.gt.s32.totalorder %v323, 0
      %vm325 = vcmp.lt.s32.totalorder %v323, 15
      %v326 = vld [vmem:[%s312] sm:$0xf]
      %v327 = vld [vmem:[%s2] sm:$0xff]
      %v328 = vld [vmem:[%s2 + $0x8] sm:$0xff]
      %v329 = vld [vmem:[%s2 + $0x10] sm:$0xff]
      %v330 = vld [vmem:[%s2 + $0x18] sm:$0xff]
      %v331 = vld [vmem:[%s2 + $0x20] sm:$0xff]
      %v332 = vld [vmem:[%s2 + $0x28] sm:$0xff]
      %v333 = vld [vmem:[%s2 + $0x30] sm:$0xff]
      %v334 = vld [vmem:[%s2 + $0x38] sm:$0xff]
      %v335 = vld [vmem:[%s2 + $0x40] sm:$0xff]
      %v336 = vld [vmem:[%s2 + $0x48] sm:$0xff]
      %v337 = vld [vmem:[%s2 + $0x50] sm:$0xff]
      %v338 = vld [vmem:[%s2 + $0x58] sm:$0xff]
      %v339 = vld [vmem:[%s2 + $0x60] sm:$0xff]
      %v340 = vld [vmem:[%s2 + $0x68] sm:$0xff]
      %v341 = vld [vmem:[%s2 + $0x70] sm:$0xff]
      %v342 = vld [vmem:[%s2 + $0x78] sm:$0xff]
      %vm343 = vcmask 523264
      %v345 = vsel %vm343, %v326, 0
      %347 = vmatpush.msra.mxu0 0.0
      %348 = vmatpush.msra.mxu0 0.0
      %349 = vmatpush.msra.mxu0 0.0
      %350 = vmatpush.msra.mxu0 0.0
      %351 = vmatpush.msra.mxu0 0.0
      %352 = vmatpush.msra.mxu0 0.0
      %353 = vmatpush.msra.mxu0 0.0
      %354 = vmatpush.msra.mxu0 0.0
      %355 = vmatpush.msra.mxu0 %v341
      %356 = vmatpush.msra.mxu0 %v339
      %357 = vmatpush.msra.mxu0 %v337
      %358 = vmatpush.msra.mxu0 %v335
      %359 = vmatpush.msra.mxu0 %v333
      %360 = vmatpush.msra.mxu0 %v331
      %361 = vmatpush.msra.mxu0 %v329
      %362 = vmatpush.msra.mxu0 %v327
      %363 = vmatmul.f32.gmra.mxu0 %v345
      %v364 = vpop.f32.mrf.mxu0
      %v365 = vadd.f32 0.0, %v364
      %366 = vdwg.mxu0
      %367 = vmatpush.msra.mxu0 0.0
      %368 = vmatpush.msra.mxu0 0.0
      %369 = vmatpush.msra.mxu0 0.0
      %370 = vmatpush.msra.mxu0 0.0
      %371 = vmatpush.msra.mxu0 0.0
      %372 = vmatpush.msra.mxu0 0.0
      %373 = vmatpush.msra.mxu0 0.0
      %374 = vmatpush.msra.mxu0 0.0
      %375 = vmatpush.msra.mxu0 %v342
      %376 = vmatpush.msra.mxu0 %v340
      %377 = vmatpush.msra.mxu0 %v338
      %378 = vmatpush.msra.mxu0 %v336
      %379 = vmatpush.msra.mxu0 %v334
      %380 = vmatpush.msra.mxu0 %v332
      %381 = vmatpush.msra.mxu0 %v330
      %382 = vmatpush.msra.mxu0 %v328
      %383 = vmatmul.f32.gmra.mxu0 %v345
      %v384 = vpop.f32.mrf.mxu0
      %v385 = vadd.f32 0.0, %v384
      %386 = vdwg.mxu0
      %387 = vst [vmem:[#allocation2] sm:$0xff] 0.0
      %388 = vst [vmem:[#allocation2 + $0x8] sm:$0xff] 0.0
      %389 = vst [vmem:[#allocation2 + $0x10] sm:$0xff] 0.0
      %390 = vst [vmem:[#allocation2 + $0x18] sm:$0xff] 0.0
      %v391 = vld [vmem:[%s317] sm:$0xff]
      %393 = vst [vmem:[#allocation1] ss:$2 sm:$0xff] %v391
      %v394 = vld.sshfl [vmem:[#allocation1] sm:$0xff pattern:$0x75316420]
      %v395 = vld.sshfl [vmem:[#allocation1 + $0x8] sm:$0xff pattern:$0x75316420]
      %398 = vst [vmem:[#allocation2 + $0x8] sm:$0xf] %v394
      %399 = vst [vmem:[#allocation2 + $0x10] sm:$0xf] %v395
      %v402 = vrot.slane %v365, 4
      %v403 = vrot.slane %v385, 4
      %406 = vst [vmem:[#allocation2 + $0x8] sm:$0xf0] %v402
      %407 = vst [vmem:[#allocation2 + $0x10] sm:$0xf0] %v403
      %v408 = vld [vmem:[#allocation2] sm:$0xff]
      %v409 = vld [vmem:[#allocation2 + $0x8] sm:$0xff]
      %v410 = vld [vmem:[#allocation2 + $0x10] sm:$0xff]
      %v411 = vsel %vm324, 1, 0
      %v412 = vperm.slane %v411, 0
      %v413 = vperm.slane %v411, 1
      %vm414 = vcmp.eq.s32.totalorder %v412, 1
      %vm415 = vcmp.eq.s32.totalorder %v413, 1
      %419 = vrot.lane.b32.xlu0 %v408, 17
      %v420 = vpop.permute.xlu0 %419
      %421 = vrot.lane.b32.xlu0 %v409, 17
      %v422 = vpop.permute.xlu0 %421
      %423 = vrot.lane.b32.xlu0 %v410, 17
      %v424 = vpop.permute.xlu0 %423
      %vm425 = vcmask 138240
      %v426 = vsel %vm425, %v420, %v422
      %v427 = vsel %vm425, %v422, %v424
      %v430 = vsel %vm414, %v426, 0.0
      %v431 = vsel %vm415, %v427, 0.0
      %432 = vst [vmem:[#allocation3] sm:$0xff] %v430
      %433 = vst [vmem:[#allocation3 + $0x8] sm:$0xff] %v431
      %v434 = vld [vmem:[#allocation2] sm:$0xff]
      %v435 = vld [vmem:[#allocation2 + $0x8] sm:$0xff]
      %v436 = vld [vmem:[#allocation2 + $0x10] sm:$0xff]
      %440 = vrot.lane.b32.xlu0 %v434, 16
      %v441 = vpop.permute.xlu0 %440
      %442 = vrot.lane.b32.xlu0 %v435, 16
      %v443 = vpop.permute.xlu0 %442
      %444 = vrot.lane.b32.xlu0 %v436, 16
      %v445 = vpop.permute.xlu0 %444
      %vm446 = vcmask 130048
      %v447 = vsel %vm446, %v441, %v443
      %v448 = vsel %vm446, %v443, %v445
      %451 = vst [vmem:[#allocation3 + $0x10] sm:$0xff] %v447
      %452 = vst [vmem:[#allocation3 + $0x18] sm:$0xff] %v448
      %v453 = vld [vmem:[#allocation2] sm:$0xff]
      %v454 = vld [vmem:[#allocation2 + $0x8] sm:$0xff]
      %v455 = vld [vmem:[#allocation2 + $0x10] sm:$0xff]
      %v456 = vsel %vm325, 1, 0
      %v457 = vperm.slane %v456, 0
      %v458 = vperm.slane %v456, 1
      %vm459 = vcmp.eq.s32.totalorder %v457, 1
      %vm460 = vcmp.eq.s32.totalorder %v458, 1
      %464 = vrot.lane.b32.xlu0 %v453, 15
      %v465 = vpop.permute.xlu0 %464
      %466 = vrot.lane.b32.xlu0 %v454, 15
      %v467 = vpop.permute.xlu0 %466
      %468 = vrot.lane.b32.xlu0 %v455, 15
      %v469 = vpop.permute.xlu0 %468
      %vm470 = vcmask 121856
      %v471 = vsel %vm470, %v465, %v467
      %v472 = vsel %vm470, %v467, %v469
      %v475 = vsel %vm459, %v471, 0.0
      %v476 = vsel %vm460, %v472, 0.0
      %477 = vst [vmem:[#allocation3 + $0x20] sm:$0xff] %v475
      %478 = vst [vmem:[#allocation3 + $0x28] sm:$0xff] %v476
      %v479 = vld [vmem:[#allocation2] sm:$0xff]
      %v480 = vld [vmem:[#allocation2 + $0x8] sm:$0xff]
      %v481 = vld [vmem:[#allocation2 + $0x10] sm:$0xff]
      %485 = vrot.lane.b32.xlu0 %v479, 1
      %v486 = vpop.permute.xlu0 %485
      %487 = vrot.lane.b32.xlu0 %v480, 1
      %v488 = vpop.permute.xlu0 %487
      %489 = vrot.lane.b32.xlu0 %v481, 1
      %v490 = vpop.permute.xlu0 %489
      %vm491 = vcmask 7168
      %v492 = vsel %vm491, %v486, %v488
      %v493 = vsel %vm491, %v488, %v490
      %v496 = vsel %vm414, %v492, 0.0
      %v497 = vsel %vm415, %v493, 0.0
      %498 = vst [vmem:[#allocation3 + $0x30] sm:$0xff] %v496
      %499 = vst [vmem:[#allocation3 + $0x38] sm:$0xff] %v497
      %v500 = vld [vmem:[#allocation2 + $0x8] sm:$0xff]
      %v501 = vld [vmem:[#allocation2 + $0x10] sm:$0xff]
      %502 = vst [vmem:[#allocation3 + $0x40] sm:$0xff] %v500
      %503 = vst [vmem:[#allocation3 + $0x48] sm:$0xff] %v501
      %v504 = vld [vmem:[#allocation2 + $0x8] sm:$0xff]
      %v505 = vld [vmem:[#allocation2 + $0x10] sm:$0xff]
      %v506 = vld [vmem:[#allocation2 + $0x18] sm:$0xff]
      %510 = vrot.lane.b32.xlu0 %v504, 127
      %v511 = vpop.permute.xlu0 %510
      %512 = vrot.lane.b32.xlu0 %v505, 127
      %v513 = vpop.permute.xlu0 %512
      %514 = vrot.lane.b32.xlu0 %v506, 127
      %v515 = vpop.permute.xlu0 %514
      %vm516 = vcmask 1039360
      %v517 = vsel %vm516, %v511, %v513
      %v518 = vsel %vm516, %v513, %v515
      %v521 = vsel %vm459, %v517, 0.0
      %v522 = vsel %vm460, %v518, 0.0
      %523 = vst [vmem:[#allocation3 + $0x50] sm:$0xff] %v521
      %524 = vst [vmem:[#allocation3 + $0x58] sm:$0xff] %v522
      %v525 = vld [vmem:[#allocation2 + $0x8] sm:$0xff]
      %v526 = vld [vmem:[#allocation2 + $0x10] sm:$0xff]
      %v527 = vld [vmem:[#allocation2 + $0x18] sm:$0xff]
      %531 = vrot.lane.b32.xlu0 %v525, 113
      %v532 = vpop.permute.xlu0 %531
      %533 = vrot.lane.b32.xlu0 %v526, 113
      %v534 = vpop.permute.xlu0 %533
      %535 = vrot.lane.b32.xlu0 %v527, 113
      %v536 = vpop.permute.xlu0 %535
      %vm537 = vcmask 924672
      %v538 = vsel %vm537, %v532, %v534
      %v539 = vsel %vm537, %v534, %v536
      %v542 = vsel %vm414, %v538, 0.0
      %v543 = vsel %vm415, %v539, 0.0
      %544 = vst [vmem:[#allocation3 + $0x60] sm:$0xff] %v542
      %545 = vst [vmem:[#allocation3 + $0x68] sm:$0xff] %v543
      %v546 = vld [vmem:[#allocation2 + $0x8] sm:$0xff]
      %v547 = vld [vmem:[#allocation2 + $0x10] sm:$0xff]
      %v548 = vld [vmem:[#allocation2 + $0x18] sm:$0xff]
      %552 = vrot.lane.b32.xlu0 %v546, 112
      %v553 = vpop.permute.xlu0 %552
      %554 = vrot.lane.b32.xlu0 %v547, 112
      %v555 = vpop.permute.xlu0 %554
      %556 = vrot.lane.b32.xlu0 %v548, 112
      %v557 = vpop.permute.xlu0 %556
      %vm558 = vcmask 916480
      %v559 = vsel %vm558, %v553, %v555
      %v560 = vsel %vm558, %v555, %v557
      %563 = vst [vmem:[#allocation3 + $0x70] sm:$0xff] %v559
      %564 = vst [vmem:[#allocation3 + $0x78] sm:$0xff] %v560
      %v565 = vld [vmem:[#allocation2 + $0x8] sm:$0xff]
      %v566 = vld [vmem:[#allocation2 + $0x10] sm:$0xff]
      %v567 = vld [vmem:[#allocation2 + $0x18] sm:$0xff]
      %571 = vrot.lane.b32.xlu0 %v565, 111
      %v572 = vpop.permute.xlu0 %571
      %573 = vrot.lane.b32.xlu0 %v566, 111
      %v574 = vpop.permute.xlu0 %573
      %575 = vrot.lane.b32.xlu0 %v567, 111
      %v576 = vpop.permute.xlu0 %575
      %vm577 = vcmask 908288
      %v578 = vsel %vm577, %v572, %v574
      %v579 = vsel %vm577, %v574, %v576
      %v582 = vsel %vm459, %v578, 0.0
      %v583 = vsel %vm460, %v579, 0.0
      %584 = vst [vmem:[#allocation3 + $0x80] sm:$0xff] %v582
      %585 = vst [vmem:[#allocation3 + $0x88] sm:$0xff] %v583
      %v586 = vld [vmem:[%s4] sm:$0xf]
      %v587 = vld [vmem:[#allocation3] sm:$0xff]
      %v588 = vld [vmem:[#allocation3 + $0x8] sm:$0xff]
      %v589 = vld [vmem:[#allocation3 + $0x10] sm:$0xff]
      %v590 = vld [vmem:[#allocation3 + $0x18] sm:$0xff]
      %v591 = vld [vmem:[#allocation3 + $0x20] sm:$0xff]
      %v592 = vld [vmem:[#allocation3 + $0x28] sm:$0xff]
      %v593 = vld [vmem:[#allocation3 + $0x30] sm:$0xff]
      %v594 = vld [vmem:[#allocation3 + $0x38] sm:$0xff]
      %v595 = vld [vmem:[#allocation3 + $0x40] sm:$0xff]
      %v596 = vld [vmem:[#allocation3 + $0x48] sm:$0xff]
      %v597 = vld [vmem:[#allocation3 + $0x50] sm:$0xff]
      %v598 = vld [vmem:[#allocation3 + $0x58] sm:$0xff]
      %v599 = vld [vmem:[#allocation3 + $0x60] sm:$0xff]
      %v600 = vld [vmem:[#allocation3 + $0x68] sm:$0xff]
      %v601 = vld [vmem:[#allocation3 + $0x70] sm:$0xff]
      %v602 = vld [vmem:[#allocation3 + $0x78] sm:$0xff]
      %v603 = vld [vmem:[#allocation3 + $0x80] sm:$0xff]
      %v604 = vld [vmem:[#allocation3 + $0x88] sm:$0xff]
      %v605 = vld [vmem:[%s5] sm:$0xf]
      %607 = vset.pattern.permute.xlu0 0
      %608 = vperm.xlu0 %607, %v605
      %v609 = vpop.permute.xlu0 %608
      %vm611 = vcmask 588800
      %v613 = vsel %vm611, %v586, 0
      %615 = vmatpush.msra.mxu0 0.0
      %616 = vmatpush.msra.mxu0 0.0
      %617 = vmatpush.msra.mxu0 0.0
      %618 = vmatpush.msra.mxu0 0.0
      %619 = vmatpush.msra.mxu0 0.0
      %620 = vmatpush.msra.mxu0 0.0
      %621 = vmatpush.msra.mxu0 0.0
      %622 = vmatpush.msra.mxu0 %v603
      %623 = vmatpush.msra.mxu0 %v601
      %624 = vmatpush.msra.mxu0 %v599
      %625 = vmatpush.msra.mxu0 %v597
      %626 = vmatpush.msra.mxu0 %v595
      %627 = vmatpush.msra.mxu0 %v593
      %628 = vmatpush.msra.mxu0 %v591
      %629 = vmatpush.msra.mxu0 %v589
      %630 = vmatpush.msra.mxu0 %v587
      %631 = vmatmul.f32.gmra.mxu0 %v613
      %v632 = vpop.f32.mrf.mxu0
      %v633 = vadd.f32 %v609, %v632
      %634 = vdwg.mxu0
      %635 = vmatpush.msra.mxu0 0.0
      %636 = vmatpush.msra.mxu0 0.0
      %637 = vmatpush.msra.mxu0 0.0
      %638 = vmatpush.msra.mxu0 0.0
      %639 = vmatpush.msra.mxu0 0.0
      %640 = vmatpush.msra.mxu0 0.0
      %641 = vmatpush.msra.mxu0 0.0
      %642 = vmatpush.msra.mxu0 %v604
      %643 = vmatpush.msra.mxu0 %v602
      %644 = vmatpush.msra.mxu0 %v600
      %645 = vmatpush.msra.mxu0 %v598
      %646 = vmatpush.msra.mxu0 %v596
      %647 = vmatpush.msra.mxu0 %v594
      %648 = vmatpush.msra.mxu0 %v592
      %649 = vmatpush.msra.mxu0 %v590
      %650 = vmatpush.msra.mxu0 %v588
      %651 = vmatmul.f32.gmra.mxu0 %v613
      %v652 = vpop.f32.mrf.mxu0
      %v653 = vadd.f32 %v609, %v652
      %654 = vdwg.mxu0
      %v655 = vmax.f32 %v633, 0.0
      %v656 = vmax.f32 %v653, 0.0
      %657 = vst [vmem:[#allocation4] sm:$0xff] 0.0
      %658 = vst [vmem:[#allocation4 + $0x8] sm:$0xff] 0.0
      %v661 = vrot.slane %v656, 4
      %vm662 = vcmask 1043456
      %v663 = vsel %vm662, %v655, %v661
      %665 = vst [vmem:[#allocation4 + $0x4] sm:$0xff] %v663
      %v666 = vld [vmem:[#allocation4] sm:$0xff]
      %v667 = vld [vmem:[#allocation4 + $0x8] sm:$0xf]
      %670 = vst [vmem:[#allocation1] ss:$2 sm:$0xff] %v666
      %s671 = scalar_lea.vmem [#allocation1], 16
      %672 = vst [vmem:[%s671] ss:$2 sm:$0xff] %v667
      %v673 = vld.sshfl [vmem:[#allocation1] sm:$0xff pattern:$0x75316420]
      %v674 = vld.sshfl [vmem:[#allocation1 + $0x8] sm:$0xff pattern:$0x75316420]
      %v675 = vld.sshfl [vmem:[#allocation1 + $0x10] sm:$0xff pattern:$0x75316420]
      %676 = vrot.lane.b32.xlu0 %v673, 17
      %v677 = vpop.permute.xlu0 %676
      %678 = vrot.lane.b32.xlu0 %v674, 17
      %v679 = vpop.permute.xlu0 %678
      %680 = vrot.lane.b32.xlu0 %v675, 17
      %v681 = vpop.permute.xlu0 %680
      %v682 = vsel %vm425, %v677, %v679
      %v683 = vsel %vm425, %v679, %v681
      %v686 = vsel %vm414, %v682, 0.0
      %v687 = vsel %vm415, %v683, 0.0
      %688 = vst [vmem:[#allocation5] sm:$0xf] %v686
      %689 = vst [vmem:[#allocation5 + $0x8] sm:$0xf] %v687
      %v690 = vld [vmem:[#allocation4] sm:$0xff]
      %v691 = vld [vmem:[#allocation4 + $0x8] sm:$0xf]
      %s694 = scalar_lea.vmem [#allocation1], 1
      %695 = vst [vmem:[%s694] ss:$2 sm:$0xff] %v690
      %s696 = scalar_lea.vmem [#allocation1], 17
      %697 = vst [vmem:[%s696] ss:$2 sm:$0xff] %v691
      %v698 = vld.sshfl [vmem:[#allocation1] sm:$0xff pattern:$0x75316420]
      %v699 = vld.sshfl [vmem:[#allocation1 + $0x8] sm:$0xff pattern:$0x75316420]
      %v700 = vld.sshfl [vmem:[#allocation1 + $0x10] sm:$0xff pattern:$0x75316420]
      %701 = vrot.lane.b32.xlu0 %v698, 16
      %v702 = vpop.permute.xlu0 %701
      %703 = vrot.lane.b32.xlu0 %v699, 16
      %v704 = vpop.permute.xlu0 %703
      %705 = vrot.lane.b32.xlu0 %v700, 16
      %v706 = vpop.permute.xlu0 %705
      %v707 = vsel %vm446, %v702, %v704
      %v708 = vsel %vm446, %v704, %v706
      %711 = vst [vmem:[#allocation5] sm:$0xf0] %v707
      %712 = vst [vmem:[#allocation5 + $0x8] sm:$0xf0] %v708
      %v713 = vld [vmem:[#allocation4] sm:$0xff]
      %v714 = vld [vmem:[#allocation4 + $0x8] sm:$0xf]
      %717 = vst [vmem:[#allocation1] ss:$2 sm:$0xff] %v713
      %s718 = scalar_lea.vmem [#allocation1], 16
      %719 = vst [vmem:[%s718] ss:$2 sm:$0xff] %v714
      %v720 = vld.sshfl [vmem:[#allocation1] sm:$0xff pattern:$0x75316420]
      %v721 = vld.sshfl [vmem:[#allocation1 + $0x8] sm:$0xff pattern:$0x75316420]
      %v722 = vld.sshfl [vmem:[#allocation1 + $0x10] sm:$0xff pattern:$0x75316420]
      %723 = vrot.lane.b32.xlu0 %v720, 15
      %v724 = vpop.permute.xlu0 %723
      %725 = vrot.lane.b32.xlu0 %v721, 15
      %v726 = vpop.permute.xlu0 %725
      %727 = vrot.lane.b32.xlu0 %v722, 15
      %v728 = vpop.permute.xlu0 %727
      %v729 = vsel %vm470, %v724, %v726
      %v730 = vsel %vm470, %v726, %v728
      %v733 = vsel %vm459, %v729, 0.0
      %v734 = vsel %vm460, %v730, 0.0
      %735 = vst [vmem:[#allocation5 + $0x10] sm:$0xf] %v733
      %736 = vst [vmem:[#allocation5 + $0x18] sm:$0xf] %v734
      %v737 = vld [vmem:[#allocation4] sm:$0xff]
      %v738 = vld [vmem:[#allocation4 + $0x8] sm:$0xf]
      %741 = vst [vmem:[#allocation1] ss:$2 sm:$0xff] %v737
      %s742 = scalar_lea.vmem [#allocation1], 16
      %743 = vst [vmem:[%s742] ss:$2 sm:$0xff] %v738
      %v744 = vld.sshfl [vmem:[#allocation1] sm:$0xff pattern:$0x75316420]
      %v745 = vld.sshfl [vmem:[#allocation1 + $0x8] sm:$0xff pattern:$0x75316420]
      %v746 = vld.sshfl [vmem:[#allocation1 + $0x10] sm:$0xff pattern:$0x75316420]
      %747 = vrot.lane.b32.xlu0 %v744, 1
      %v748 = vpop.permute.xlu0 %747
      %749 = vrot.lane.b32.xlu0 %v745, 1
      %v750 = vpop.permute.xlu0 %749
      %751 = vrot.lane.b32.xlu0 %v746, 1
      %v752 = vpop.permute.xlu0 %751
      %v753 = vsel %vm491, %v748, %v750
      %v754 = vsel %vm491, %v750, %v752
      %v757 = vsel %vm414, %v753, 0.0
      %v758 = vsel %vm415, %v754, 0.0
      %v761 = vrot.slane %v757, 4
      %v762 = vrot.slane %v758, 4
      %765 = vst [vmem:[#allocation5 + $0x10] sm:$0xf0] %v761
      %766 = vst [vmem:[#allocation5 + $0x18] sm:$0xf0] %v762
      %v767 = vld [vmem:[#allocation4 + $0x4] sm:$0xff]
      %769 = vst [vmem:[#allocation1] ss:$2 sm:$0xff] %v767
      %v770 = vld.sshfl [vmem:[#allocation1] sm:$0xff pattern:$0x75316420]
      %v771 = vld.sshfl [vmem:[#allocation1 + $0x8] sm:$0xff pattern:$0x75316420]
      %774 = vst [vmem:[#allocation5 + $0x20] sm:$0xf] %v770
      %775 = vst [vmem:[#allocation5 + $0x28] sm:$0xf] %v771
      %v776 = vld [vmem:[#allocation4 + $0x4] sm:$0xff]
      %v777 = vld [vmem:[#allocation4 + $0xc] sm:$0xf]
      %780 = vst [vmem:[#allocation1] ss:$2 sm:$0xff] %v776
      %s781 = scalar_lea.vmem [#allocation1], 16
      %782 = vst [vmem:[%s781] ss:$2 sm:$0xff] %v777
      %v783 = vld.sshfl [vmem:[#allocation1] sm:$0xff pattern:$0x75316420]
      %v784 = vld.sshfl [vmem:[#allocation1 + $0x8] sm:$0xff pattern:$0x75316420]
      %v785 = vld.sshfl [vmem:[#allocation1 + $0x10] sm:$0xff pattern:$0x75316420]
      %786 = vrot.lane.b32.xlu0 %v783, 127
      %v787 = vpop.permute.xlu0 %786
      %788 = vrot.lane.b32.xlu0 %v784, 127
      %v789 = vpop.permute.xlu0 %788
      %790 = vrot.lane.b32.xlu0 %v785, 127
      %v791 = vpop.permute.xlu0 %790
      %v792 = vsel %vm516, %v787, %v789
      %v793 = vsel %vm516, %v789, %v791
      %v796 = vsel %vm459, %v792, 0.0
      %v797 = vsel %vm460, %v793, 0.0
      %v800 = vrot.slane %v796, 4
      %v801 = vrot.slane %v797, 4
      %804 = vst [vmem:[#allocation5 + $0x20] sm:$0xf0] %v800
      %805 = vst [vmem:[#allocation5 + $0x28] sm:$0xf0] %v801
      %v806 = vld [vmem:[#allocation4 + $0x4] sm:$0xff]
      %v807 = vld [vmem:[#allocation4 + $0xc] sm:$0xf]
      %810 = vst [vmem:[#allocation1] ss:$2 sm:$0xff] %v806
      %s811 = scalar_lea.vmem [#allocation1], 16
      %812 = vst [vmem:[%s811] ss:$2 sm:$0xff] %v807
      %v813 = vld.sshfl [vmem:[#allocation1] sm:$0xff pattern:$0x75316420]
      %v814 = vld.sshfl [vmem:[#allocation1 + $0x8] sm:$0xff pattern:$0x75316420]
      %v815 = vld.sshfl [vmem:[#allocation1 + $0x10] sm:$0xff pattern:$0x75316420]
      %816 = vrot.lane.b32.xlu0 %v813, 113
      %v817 = vpop.permute.xlu0 %816
      %818 = vrot.lane.b32.xlu0 %v814, 113
      %v819 = vpop.permute.xlu0 %818
      %820 = vrot.lane.b32.xlu0 %v815, 113
      %v821 = vpop.permute.xlu0 %820
      %v822 = vsel %vm537, %v817, %v819
      %v823 = vsel %vm537, %v819, %v821
      %v826 = vsel %vm414, %v822, 0.0
      %v827 = vsel %vm415, %v823, 0.0
      %828 = vst [vmem:[#allocation5 + $0x30] sm:$0xf] %v826
      %829 = vst [vmem:[#allocation5 + $0x38] sm:$0xf] %v827
      %v830 = vld [vmem:[#allocation4 + $0x4] sm:$0xff]
      %v831 = vld [vmem:[#allocation4 + $0xc] sm:$0xf]
      %s834 = scalar_lea.vmem [#allocation1], 1
      %835 = vst [vmem:[%s834] ss:$2 sm:$0xff] %v830
      %s836 = scalar_lea.vmem [#allocation1], 17
      %837 = vst [vmem:[%s836] ss:$2 sm:$0xff] %v831
      %v838 = vld.sshfl [vmem:[#allocation1] sm:$0xff pattern:$0x75316420]
      %v839 = vld.sshfl [vmem:[#allocation1 + $0x8] sm:$0xff pattern:$0x75316420]
      %v840 = vld.sshfl [vmem:[#allocation1 + $0x10] sm:$0xff pattern:$0x75316420]
      %841 = vrot.lane.b32.xlu0 %v838, 112
      %v842 = vpop.permute.xlu0 %841
      %843 = vrot.lane.b32.xlu0 %v839, 112
      %v844 = vpop.permute.xlu0 %843
      %845 = vrot.lane.b32.xlu0 %v840, 112
      %v846 = vpop.permute.xlu0 %845
      %v847 = vsel %vm558, %v842, %v844
      %v848 = vsel %vm558, %v844, %v846
      %851 = vst [vmem:[#allocation5 + $0x30] sm:$0xf0] %v847
      %852 = vst [vmem:[#allocation5 + $0x38] sm:$0xf0] %v848
      %v853 = vld [vmem:[#allocation4 + $0x4] sm:$0xff]
      %v854 = vld [vmem:[#allocation4 + $0xc] sm:$0xf]
      %857 = vst [vmem:[#allocation1] ss:$2 sm:$0xff] %v853
      %s858 = scalar_lea.vmem [#allocation1], 16
      %859 = vst [vmem:[%s858] ss:$2 sm:$0xff] %v854
      %v860 = vld.sshfl [vmem:[#allocation1] sm:$0xff pattern:$0x75316420]
      %v861 = vld.sshfl [vmem:[#allocation1 + $0x8] sm:$0xff pattern:$0x75316420]
      %v862 = vld.sshfl [vmem:[#allocation1 + $0x10] sm:$0xff pattern:$0x75316420]
      %863 = vrot.lane.b32.xlu0 %v860, 111
      %v864 = vpop.permute.xlu0 %863
      %865 = vrot.lane.b32.xlu0 %v861, 111
      %v866 = vpop.permute.xlu0 %865
      %867 = vrot.lane.b32.xlu0 %v862, 111
      %v868 = vpop.permute.xlu0 %867
      %v869 = vsel %vm577, %v864, %v866
      %v870 = vsel %vm577, %v866, %v868
      %v873 = vsel %vm459, %v869, 0.0
      %v874 = vsel %vm460, %v870, 0.0
      %875 = vst [vmem:[#allocation5 + $0x40] sm:$0xf] %v873
      %876 = vst [vmem:[#allocation5 + $0x48] sm:$0xf] %v874
      %v877 = vld [vmem:[%s6] sm:$0xf]
      %v878 = vld [vmem:[#allocation5] sm:$0xff]
      %v879 = vld [vmem:[#allocation5 + $0x8] sm:$0xff]
      %v880 = vld [vmem:[#allocation5 + $0x10] sm:$0xff]
      %v881 = vld [vmem:[#allocation5 + $0x18] sm:$0xff]
      %v882 = vld [vmem:[#allocation5 + $0x20] sm:$0xff]
      %v883 = vld [vmem:[#allocation5 + $0x28] sm:$0xff]
      %v884 = vld [vmem:[#allocation5 + $0x30] sm:$0xff]
      %v885 = vld [vmem:[#allocation5 + $0x38] sm:$0xff]
      %v886 = vld [vmem:[#allocation5 + $0x40] sm:$0xf]
      %v887 = vld [vmem:[#allocation5 + $0x48] sm:$0xf]
      %v888 = vld [vmem:[%s7] sm:$0xf]
      %890 = vset.pattern.permute.xlu0 0
      %891 = vperm.xlu0 %890, %v888
      %v892 = vpop.permute.xlu0 %891
      %vm894 = vcmask 293888
      %v896 = vsel %vm894, %v877, 0
      %v899 = vsel %vm662, %v886, 0
      %v902 = vsel %vm662, %v887, 0
      %904 = vmatpush.msra.mxu0 0.0
      %905 = vmatpush.msra.mxu0 0.0
      %906 = vmatpush.msra.mxu0 0.0
      %907 = vmatpush.msra.mxu0 0.0
      %908 = vmatpush.msra.mxu0 0.0
      %909 = vmatpush.msra.mxu0 0.0
      %910 = vmatpush.msra.mxu0 0.0
      %911 = vmatpush.msra.mxu0 0.0
      %912 = vmatpush.msra.mxu0 0.0
      %913 = vmatpush.msra.mxu0 0.0
      %914 = vmatpush.msra.mxu0 0.0
      %915 = vmatpush.msra.mxu0 %v899
      %916 = vmatpush.msra.mxu0 %v884
      %917 = vmatpush.msra.mxu0 %v882
      %918 = vmatpush.msra.mxu0 %v880
      %919 = vmatpush.msra.mxu0 %v878
      %920 = vmatmul.f32.gmra.mxu0 %v896
      %v921 = vpop.f32.mrf.mxu0
      %v922 = vadd.f32 %v892, %v921
      %923 = vdwg.mxu0
      %924 = vmatpush.msra.mxu0 0.0
      %925 = vmatpush.msra.mxu0 0.0
      %926 = vmatpush.msra.mxu0 0.0
      %927 = vmatpush.msra.mxu0 0.0
      %928 = vmatpush.msra.mxu0 0.0
      %929 = vmatpush.msra.mxu0 0.0
      %930 = vmatpush.msra.mxu0 0.0
      %931 = vmatpush.msra.mxu0 0.0
      %932 = vmatpush.msra.mxu0 0.0
      %933 = vmatpush.msra.mxu0 0.0
      %934 = vmatpush.msra.mxu0 0.0
      %935 = vmatpush.msra.mxu0 %v902
      %936 = vmatpush.msra.mxu0 %v885
      %937 = vmatpush.msra.mxu0 %v883
      %938 = vmatpush.msra.mxu0 %v881
      %939 = vmatpush.msra.mxu0 %v879
      %940 = vmatmul.f32.gmra.mxu0 %v896
      %v941 = vpop.f32.mrf.mxu0
      %v942 = vadd.f32 %v892, %v941
      %943 = vdwg.mxu0
      %v944 = vmax.f32 %v922, 0.0
      %v945 = vmax.f32 %v942, 0.0
      %v948 = vrot.slane %v945, 4
      %v949 = vsel %vm662, %v944, %v948
      %951 = vst [vmem:[%s322] sm:$0xff] %v949
      %p952 = scmp.lt.s32.totalorder %s19, 1
      %s953 = scalar_select %p952, %s19, 1
      %s954 = smul.addr %s953, 2
      %s955 = smul.addr %s954, 4
      %s956 = scalar_lea.vmem %s8, %s955
      // Predicated region
      $region53: #{up_forward.1} parent=51 // pred_check
        %p957 = pneg %p215
      $region54: #{up_forward.1} parent=51 // pred_check_branch
        %959 = sbr.rel (%p957) target = $region56
      $region55: #{up_forward.1} parent=51 // pred_region
        _
      $region56: #{up_forward.1} parent=51 // pred_fallthru
        _
    $region52: #{up_forward.1} parent=5 // pred_fallthru
      _
    %p960 = scmp.le.s32.totalorder 2, %s14
    // Predicated region
    $region57: #{up_forward.1} parent=5 // pred_check
      %p961 = pneg %p960
    $region58: #{up_forward.1} parent=5 // pred_check_branch
      %963 = sbr.rel (%p961) target = $region60
    $region59: #{up_forward.1} parent=5 // pred_region
      %s964 = ssub.s32 %s14, 2
      // Predicated region
      $region61: #{up_forward.1} parent=59 // pred_check
        %p965 = pneg %p221
      $region62: #{up_forward.1} parent=59 // pred_check_branch
        %967 = sbr.rel (%p965) target = $region64
      $region63: #{up_forward.1} parent=59 // pred_region
        %p968 = scmp.lt.s32.totalorder %s20, 1
        %s969 = scalar_select %p968, %s20, 1
        %s970 = smul.addr %s969, 2
        %s971 = smul.addr %s970, 4
        %s972 = scalar_lea.vmem %s8, %s971
      $region64: #{up_forward.1} parent=59 // pred_fallthru
        _
    $region60: #{up_forward.1} parent=5 // pred_fallthru
      _
  $region6: #{up_forward.1} parent=0 // loop_footer
    %s18 = sadd.s32 1, %s14
  $region7: #{up_forward.1} parent=0 // loop_footer_branch
    %13 = sbr.rel target = $region3
  $region8: #{up_forward.1} parent=0 // loop_exit
    _

</llo_original>
